<compile_context>
chip_gen: v7x
topology: tpu7x:2x2x1
jax: 0.10.0
libtpu: 0.0.40
codegen_flags: <defaults>
</compile_context>

<pallas_src>
import functools

import jax
import jax.numpy as jnp
from jax.experimental import pallas as pl
from jax.experimental.pallas import tpu as pltpu


def _round_up(n: int, m: int) -> int:
    return ((n + m - 1) // m) * m


def _fused_mlp_kernel(x_ref, *refs, num_layers: int):
    """Fused [Linear(+ReLU)]*L on one batch tile; intermediates stay in vregs."""
    o_ref = refs[-1]
    h = x_ref[...]                                        # (TILE_B, n_in)
    for i in range(num_layers):
        w = refs[2 * i][...]                              # (K_i, N_i)
        b = refs[2 * i + 1][...]                          # (1, N_i), f32, broadcasts over rows
        h = jnp.dot(h.astype(w.dtype), w,
                    preferred_element_type=jnp.float32,
                    precision=jax.lax.Precision.HIGHEST) + b
        if i < num_layers - 1:
            h = jnp.maximum(h, 0.0)
    o_ref[...] = h.astype(o_ref.dtype)                    # (TILE_B, 1) narrow store


def mlp_regressor_forward(x, params, *, tile_b=2048, use_bf16=False):
    """Matches MLPRegressor.forward: hidden layers are Linear+ReLU, head is Linear(., 1).

    Single fused pallas_call, gridded over the batch dimension.
    Returns (batch, 1) float32.
    """
    B, n_in = x.shape
    num_layers = len(params)

    ws = [w for w, _ in params]
    bs = [b.astype(jnp.float32) for _, b in params]       # biases stay f32 (tiny, exact add)
    if use_bf16:
        x = x.astype(jnp.bfloat16)
        ws = [w.astype(jnp.bfloat16) for w in ws]

    # ---- batch tiling -------------------------------------------------------
    # tile cap: user value rounded to a multiple of 256 (and at least 256).
    tile_cap = max(256, _round_up(int(tile_b), 256))
    if B <= 512:
        # Tiny batch: one grid step, pad at most 7 rows to satisfy the x8 sublane rule.
        tile_B = _round_up(B, 8)
    else:
        # Medium/large batch: at least 2 grid steps so ("parallel",) shards across
        # both TensorCores on v7x; capped at tile_cap rows per step.
        tile_B = min(tile_cap, _round_up(pl.cdiv(B, 2), 8))
    B_pad = _round_up(B, tile_B)
    if B_pad != B:
        x = jnp.pad(x, ((0, B_pad - B), (0, 0)))
    grid = (B_pad // tile_B,)

    # ---- specs --------------------------------------------------------------
    in_specs = [pl.BlockSpec((tile_B, n_in), lambda i: (i, 0))]
    flat_params = []
    for w, b in zip(ws, bs):
        # Full-array blocks, resident in VMEM for every grid step.
        in_specs.append(pl.BlockSpec(w.shape, lambda i: (0, 0)))
        in_specs.append(pl.BlockSpec(b.shape, lambda i: (0, 0)))
        flat_params += [w, b]

    # ---- advisory cost (true, unpadded head shapes) -------------------------
    x_itemsize = jnp.dtype(x.dtype).itemsize
    flops = 2 * B_pad * sum(int(w.shape[0]) * int(w.shape[1]) for w in ws)
    bytes_accessed = (
        B_pad * n_in * x_itemsize
        + sum(int(w.size) * jnp.dtype(w.dtype).itemsize for w in ws)
        + sum(int(b.size) * 4 for b in bs)
        + B_pad * 1 * 4
    )
    cost = pl.CostEstimate(flops=flops, transcendentals=0,
                           bytes_accessed=bytes_accessed)

    kernel = functools.partial(_fused_mlp_kernel, num_layers=num_layers)
    out = pl.pallas_call(
        kernel,
        out_shape=jax.ShapeDtypeStruct((B_pad, 1), jnp.float32),
        grid=grid,
        in_specs=in_specs,
        out_specs=pl.BlockSpec((tile_B, 1), lambda i: (i, 0)),
        compiler_params=pltpu.CompilerParams(
            dimension_semantics=("parallel",)),   # both TCs on v7x; no-op on v5e/v6e
        cost_estimate=cost,
    )(x, *flat_params)

    return out if B_pad == B else out[:B]


def init_mlp_params(key, number_inputs, hidden_layers):
    """Deterministic init mimicking nn.Linear's U(-1/sqrt(fan_in), 1/sqrt(fan_in))."""
    sizes = [number_inputs] + list(hidden_layers) + [1]
    params = []
    for fan_in, fan_out in zip(sizes[:-1], sizes[1:]):
        key, kw, kb = jax.random.split(key, 3)
        bound = 1.0 / jnp.sqrt(jnp.float32(fan_in))
        # stored as (in, out) so the kernel computes y = x @ W + b directly
        w = jax.random.uniform(kw, (fan_in, fan_out), jnp.float32, -bound, bound)
        b = jax.random.uniform(kb, (1, fan_out), jnp.float32, -bound, bound)
        params.append((w, b))
    return params


def _reference_forward(x, params):
    h = x
    for i, (w, b) in enumerate(params):
        h = jnp.dot(h, w, precision=jax.lax.Precision.HIGHEST) + b
        if i < len(params) - 1:
            h = jnp.maximum(h, 0.0)
    return h


if __name__ == "__main__":
    key = jax.random.PRNGKey(0)
    key, kx, kx2 = jax.random.split(key, 3)

    number_inputs = 32
    hidden_layers = [32, 16]            # MLPRegressor(number_inputs=32, hidden_layers=[32, 16])
    params = init_mlp_params(key, number_inputs, hidden_layers)

    # Small batch: single grid step, no padding.
    batch = 8
    x = jax.random.normal(kx, (batch, number_inputs), jnp.float32)
    y = mlp_regressor_forward(x, params)
    jax.block_until_ready(y)
    y_ref = _reference_forward(x, params)
    assert y.shape == (batch, 1)
    assert jnp.allclose(y, y_ref, atol=1e-4, rtol=1e-4)

    # Non-multiple medium batch: 2 grid steps (both TCs on v7x), tail padded to x8 only.
    batch2 = 1037
    x2 = jax.random.normal(kx2, (batch2, number_inputs), jnp.float32)
    y2 = mlp_regressor_forward(x2, params, tile_b=2048)
    jax.block_until_ready(y2)
    y2_ref = _reference_forward(x2, params)
    assert y2.shape == (batch2, 1)
    assert jnp.allclose(y2, y2_ref, atol=1e-4, rtol=1e-4)

    # Optional bf16-activation/weight path (f32 accumulation) — loose tolerance vs f32 ref.
    y3 = mlp_regressor_forward(x2, params, use_bf16=True)
    jax.block_until_ready(y3)
    assert y3.shape == (batch2, 1)
    assert float(jnp.max(jnp.abs(y3 - y2_ref))) < 0.1

    print("KERNEL_OK")
</pallas_src>

<mosaic_0001>
module attributes {stable_mosaic.version = 11 : i64} {
  func.func @_fused_mlp_kernel(%arg0: i32, %arg1: memref<8x32xf32, #tpu.memory_space<vmem>>, %arg2: memref<32x32xf32, #tpu.memory_space<vmem>>, %arg3: memref<1x32xf32, #tpu.memory_space<vmem>>, %arg4: memref<32x16xf32, #tpu.memory_space<vmem>>, %arg5: memref<1x16xf32, #tpu.memory_space<vmem>>, %arg6: memref<16x1xf32, #tpu.memory_space<vmem>>, %arg7: memref<1x1xf32, #tpu.memory_space<vmem>>, %arg8: memref<8x1xf32, #tpu.memory_space<vmem>>) attributes {dimension_semantics = [#tpu.dimension_semantics<parallel>], iteration_bounds = array<i64: 1>, scalar_prefetch = 0 : i64, scratch_operands = 0 : i64, tpu.core_type = #tpu.core_type<tc>, window_params = [{transform_indices = @transform_0, window_bounds = array<i64: 8, 32>}, {pipeline_mode = #tpu.pipeline_mode<synchronous>, transform_indices = @transform_1, window_bounds = array<i64: 32, 32>}, {pipeline_mode = #tpu.pipeline_mode<synchronous>, transform_indices = @transform_2, window_bounds = array<i64: 1, 32>}, {pipeline_mode = #tpu.pipeline_mode<synchronous>, transform_indices = @transform_3, window_bounds = array<i64: 32, 16>}, {pipeline_mode = #tpu.pipeline_mode<synchronous>, transform_indices = @transform_4, window_bounds = array<i64: 1, 16>}, {pipeline_mode = #tpu.pipeline_mode<synchronous>, transform_indices = @transform_5, window_bounds = array<i64: 16, 1>}, {pipeline_mode = #tpu.pipeline_mode<synchronous>, transform_indices = @transform_6, window_bounds = array<i64: 1, 1>}, {transform_indices = @transform_7, window_bounds = array<i64: 8, 1>}]} {
    %c0 = arith.constant 0 : index
    %c0_0 = arith.constant 0 : index
    %0 = vector.load %arg1[%c0, %c0_0] : memref<8x32xf32, #tpu.memory_space<vmem>>, vector<8x32xf32>
    %c0_1 = arith.constant 0 : index
    %c0_2 = arith.constant 0 : index
    %1 = vector.load %arg2[%c0_1, %c0_2] : memref<32x32xf32, #tpu.memory_space<vmem>>, vector<32x32xf32>
    %c0_3 = arith.constant 0 : index
    %c0_4 = arith.constant 0 : index
    %2 = vector.load %arg3[%c0_3, %c0_4] : memref<1x32xf32, #tpu.memory_space<vmem>>, vector<1x32xf32>
    %cst = arith.constant dense<0.000000e+00> : vector<8x32xf32>
    %3 = tpu.matmul %0, %1, %cst {dimension_numbers = #tpu.dot_dimension_numbers<[1], [0], [0], [1], [0, 0, 1, 1], [], []>, precision = #tpu.contract_precision<fp32>} : vector<8x32xf32>, vector<32x32xf32>, vector<8x32xf32> -> vector<8x32xf32>
    %4 = vector.broadcast %2 : vector<1x32xf32> to vector<8x32xf32>
    %5 = arith.addf %3, %4 : vector<8x32xf32>
    %cst_5 = arith.constant 0.000000e+00 : f32
    %6 = vector.broadcast %cst_5 : f32 to vector<8x32xf32>
    %7 = arith.maximumf %5, %6 : vector<8x32xf32>
    %c0_6 = arith.constant 0 : index
    %c0_7 = arith.constant 0 : index
    %8 = vector.load %arg4[%c0_6, %c0_7] : memref<32x16xf32, #tpu.memory_space<vmem>>, vector<32x16xf32>
    %c0_8 = arith.constant 0 : index
    %c0_9 = arith.constant 0 : index
    %9 = vector.load %arg5[%c0_8, %c0_9] : memref<1x16xf32, #tpu.memory_space<vmem>>, vector<1x16xf32>
    %cst_10 = arith.constant dense<0.000000e+00> : vector<8x16xf32>
    %10 = tpu.matmul %7, %8, %cst_10 {dimension_numbers = #tpu.dot_dimension_numbers<[1], [0], [0], [1], [0, 0, 1, 1], [], []>, precision = #tpu.contract_precision<fp32>} : vector<8x32xf32>, vector<32x16xf32>, vector<8x16xf32> -> vector<8x16xf32>
    %11 = vector.broadcast %9 : vector<1x16xf32> to vector<8x16xf32>
    %12 = arith.addf %10, %11 : vector<8x16xf32>
    %cst_11 = arith.constant 0.000000e+00 : f32
    %13 = vector.broadcast %cst_11 : f32 to vector<8x16xf32>
    %14 = arith.maximumf %12, %13 : vector<8x16xf32>
    %c0_12 = arith.constant 0 : index
    %c0_13 = arith.constant 0 : index
    %15 = vector.load %arg6[%c0_12, %c0_13] : memref<16x1xf32, #tpu.memory_space<vmem>>, vector<16x1xf32>
    %c0_14 = arith.constant 0 : index
    %c0_15 = arith.constant 0 : index
    %16 = vector.load %arg7[%c0_14, %c0_15] : memref<1x1xf32, #tpu.memory_space<vmem>>, vector<1x1xf32>
    %cst_16 = arith.constant dense<0.000000e+00> : vector<8x1xf32>
    %17 = tpu.matmul %14, %15, %cst_16 {dimension_numbers = #tpu.dot_dimension_numbers<[1], [0], [0], [1], [0, 0, 1, 1], [], []>, precision = #tpu.contract_precision<fp32>} : vector<8x16xf32>, vector<16x1xf32>, vector<8x1xf32> -> vector<8x1xf32>
    %18 = vector.broadcast %16 : vector<1x1xf32> to vector<8x1xf32>
    %19 = arith.addf %17, %18 : vector<8x1xf32>
    %c0_17 = arith.constant 0 : index
    %c0_18 = arith.constant 0 : index
    %20 = vector.load %arg8[%c0_17, %c0_18] : memref<8x1xf32, #tpu.memory_space<vmem>>, vector<8x1xf32>
    tpu.vector_store %arg8[%c0_17, %c0_18], %19 {strides = array<i32>} : memref<8x1xf32, #tpu.memory_space<vmem>>, vector<8x1xf32>,
    return
  }
  func.func @transform_0(%arg0: i32) -> (i32, i32) {
    %c0_i32 = arith.constant 0 : i32
    %c0_i32_0 = arith.constant 0 : i32
    return %arg0, %c0_i32 : i32, i32
  }
  func.func @transform_1(%arg0: i32) -> (i32, i32) {
    %c0_i32 = arith.constant 0 : i32
    %c0_i32_0 = arith.constant 0 : i32
    %c0_i32_1 = arith.constant 0 : i32
    return %c0_i32, %c0_i32_0 : i32, i32
  }
  func.func @transform_2(%arg0: i32) -> (i32, i32) {
    %c0_i32 = arith.constant 0 : i32
    %c0_i32_0 = arith.constant 0 : i32
    %c0_i32_1 = arith.constant 0 : i32
    return %c0_i32, %c0_i32_0 : i32, i32
  }
  func.func @transform_3(%arg0: i32) -> (i32, i32) {
    %c0_i32 = arith.constant 0 : i32
    %c0_i32_0 = arith.constant 0 : i32
    %c0_i32_1 = arith.constant 0 : i32
    return %c0_i32, %c0_i32_0 : i32, i32
  }
  func.func @transform_4(%arg0: i32) -> (i32, i32) {
    %c0_i32 = arith.constant 0 : i32
    %c0_i32_0 = arith.constant 0 : i32
    %c0_i32_1 = arith.constant 0 : i32
    return %c0_i32, %c0_i32_0 : i32, i32
  }
  func.func @transform_5(%arg0: i32) -> (i32, i32) {
    %c0_i32 = arith.constant 0 : i32
    %c0_i32_0 = arith.constant 0 : i32
    %c0_i32_1 = arith.constant 0 : i32
    return %c0_i32, %c0_i32_0 : i32, i32
  }
  func.func @transform_6(%arg0: i32) -> (i32, i32) {
    %c0_i32 = arith.constant 0 : i32
    %c0_i32_0 = arith.constant 0 : i32
    %c0_i32_1 = arith.constant 0 : i32
    return %c0_i32, %c0_i32_0 : i32, i32
  }
  func.func @transform_7(%arg0: i32) -> (i32, i32) {
    %c0_i32 = arith.constant 0 : i32
    %c0_i32_0 = arith.constant 0 : i32
    return %arg0, %c0_i32 : i32, i32
  }
}

</mosaic_0001>

<llo_original>
// kernel: tpu_custom_call.1
$region0: #{tpu_custom_call.1}
  #allocation0 [shape = 'u32[]', space=smem, size = 0x4, offset = 0x4, fixed_abs, tag = 'smem constant byte address 0x4 - core index']
  #allocation1 [shape = 'u32[144,128]{1,0:T(1,128)}', space=vmem, size = 0x12000, scoped, tag = 'internal scratch']
  #allocation2 [shape = 'f32[1,1]{1,0:T(1,128)S(1)}', space=vmem, size = 0x200, scoped, tag = 'scoped memory for tpu_custom_call.1']
  %s0 = inlined_call_operand.vmem [shape: f32[8,32], index: 0, kind: input, shape index: {}]
  %s1 = inlined_call_operand.vmem [shape: f32[32,32], index: 1, kind: input, shape index: {}]
  %s2 = inlined_call_operand.vmem [shape: f32[1,32], index: 2, kind: input, shape index: {}]
  %s3 = inlined_call_operand.vmem [shape: f32[32,16], index: 3, kind: input, shape index: {}]
  %s4 = inlined_call_operand.vmem [shape: f32[1,16], index: 4, kind: input, shape index: {}]
  %s5 = inlined_call_operand.vmem [shape: f32[16,1], index: 5, kind: input, shape index: {}]
  %s6 = inlined_call_operand.<no memory space> [shape: f32[1,1], index: 6, kind: input, shape index: {}]
  %s7 = inlined_call_operand.vmem [shape: f32[8,1], index: 7, kind: output, shape index: {}]
  %s8 = sld [smem:[#allocation0]]
  $region38: #{tpu_custom_call.1} parent=0
    _
  %s10 = ssub.s32 1, %s8
  %s11 = scalar_select 0, %s10, %s8
  %v12 = vstv %s6
  %13 = vst [vmem:[#allocation2] sm:$0x1] %v12
  // Predicated region
  $region2: #{tpu_custom_call.1} parent=0 // pred_check
    _
  $region3: #{tpu_custom_call.1} parent=0 // pred_check_branch
    %15 = sbr.rel (0) target = $region5
  $region4: #{tpu_custom_call.1} parent=0 // pred_region
    _
  $region5: #{tpu_custom_call.1} parent=0 // pred_fallthru
    _
  // Predicated region
  $region6: #{tpu_custom_call.1} parent=0 // pred_check
    _
  $region7: #{tpu_custom_call.1} parent=0 // pred_check_branch
    %17 = sbr.rel (0) target = $region9
  $region8: #{tpu_custom_call.1} parent=0 // pred_region
    _
  $region9: #{tpu_custom_call.1} parent=0 // pred_fallthru
    _
  // Predicated region
  $region10: #{tpu_custom_call.1} parent=0 // pred_check
    _
  $region11: #{tpu_custom_call.1} parent=0 // pred_check_branch
    %19 = sbr.rel (0) target = $region13
  $region12: #{tpu_custom_call.1} parent=0 // pred_region
    _
  $region13: #{tpu_custom_call.1} parent=0 // pred_fallthru
    _
  // Predicated region
  $region14: #{tpu_custom_call.1} parent=0 // pred_check
    _
  $region15: #{tpu_custom_call.1} parent=0 // pred_check_branch
    %21 = sbr.rel (0) target = $region17
  $region16: #{tpu_custom_call.1} parent=0 // pred_region
    _
  $region17: #{tpu_custom_call.1} parent=0 // pred_fallthru
    _
  // Predicated region
  $region18: #{tpu_custom_call.1} parent=0 // pred_check
    _
  $region19: #{tpu_custom_call.1} parent=0 // pred_check_branch
    %23 = sbr.rel (0) target = $region21
  $region20: #{tpu_custom_call.1} parent=0 // pred_region
    _
  $region21: #{tpu_custom_call.1} parent=0 // pred_fallthru
    _
  // Predicated region
  $region22: #{tpu_custom_call.1} parent=0 // pred_check
    _
  $region23: #{tpu_custom_call.1} parent=0 // pred_check_branch
    %25 = sbr.rel (0) target = $region25
  $region24: #{tpu_custom_call.1} parent=0 // pred_region
    _
  $region25: #{tpu_custom_call.1} parent=0 // pred_fallthru
    _
  // Predicated region
  $region26: #{tpu_custom_call.1} parent=0 // pred_check
    _
  $region27: #{tpu_custom_call.1} parent=0 // pred_check_branch
    %27 = sbr.rel (0) target = $region29
  $region28: #{tpu_custom_call.1} parent=0 // pred_region
    _
  $region29: #{tpu_custom_call.1} parent=0 // pred_fallthru
    _
  %v28 = vld [vmem:[%s0] sm:$0xff]
  %v29 = vld [vmem:[%s1] sm:$0xff]
  %v30 = vld [vmem:[%s1 + $0x8] sm:$0xff]
  %v31 = vld [vmem:[%s1 + $0x10] sm:$0xff]
  %v32 = vld [vmem:[%s1 + $0x18] sm:$0xff]
  %v33 = vld [vmem:[%s2] sm:$0x1]
  %v35 = vlaneseq
  %v36 = vshrl.u32 %v35, 7
  %v37 = vsub.s32 0, %v36
  %v38 = vrot.slane %v33, %v37
  %vm40 = vcmask 261120
  %v42 = vsel %vm40, %v28, 0
  %44 = vmatprep.subr.mxu0 0.0
  %v45 = vand.u32 %v29, 4294901760
  %46 = vmatpush1.msra.mxu0 %v45
  %47 = vmatprep.subr.mxu0 0.0
  %v48 = vand.u32 %v30, 4294901760
  %49 = vmatpush1.msra.mxu0 %v48
  %50 = vmatprep.subr.mxu0 0.0
  %v51 = vand.u32 %v31, 4294901760
  %52 = vmatpush1.msra.mxu0 %v51
  %53 = vmatprep.subr.mxu0 0.0
  %v54 = vand.u32 %v32, 4294901760
  %55 = vmatpush1.msra.mxu0 %v54
  %56 = vmatprep.subr.mxu0 0.0
  %57 = vmatpush1.msra.mxu0 0.0
  %58 = vmatprep.subr.mxu0 0.0
  %59 = vmatpush1.msra.mxu0 0.0
  %60 = vmatprep.subr.mxu0 0.0
  %61 = vmatpush1.msra.mxu0 0.0
  %62 = vmatprep.subr.mxu0 0.0
  %63 = vmatpush1.msra.mxu0 0.0
  %64 = vmatprep.subr.mxu0 0.0
  %65 = vmatpush1.msra.mxu0 0.0
  %66 = vmatprep.subr.mxu0 0.0
  %67 = vmatpush1.msra.mxu0 0.0
  %68 = vmatprep.subr.mxu0 0.0
  %69 = vmatpush1.msra.mxu0 0.0
  %70 = vmatprep.subr.mxu0 0.0
  %71 = vmatpush1.msra.mxu0 0.0
  %72 = vmatprep.subr.mxu0 0.0
  %73 = vmatpush1.msra.mxu0 0.0
  %74 = vmatprep.subr.mxu0 0.0
  %75 = vmatpush1.msra.mxu0 0.0
  %76 = vmatprep.subr.mxu0 0.0
  %77 = vmatpush1.msra.mxu0 0.0
  %78 = vmatprep.subr.mxu0 0.0
  %79 = vmatpush1.msra.mxu0 0.0
  %80 = vmatprep.subr.mxu0 0.0
  %81 = vmatpush1.msra.mxu0 0.0
  %82 = vmatprep.subr.mxu0 0.0
  %83 = vmatpush1.msra.mxu0 0.0
  %84 = vmatprep.subr.mxu0 0.0
  %85 = vmatpush1.msra.mxu0 0.0
  %86 = vmatprep.subr.mxu0 0.0
  %87 = vmatpush1.msra.mxu0 0.0
  %88 = vmatprep.subr.mxu0 0.0
  %89 = vmatpush1.msra.mxu0 0.0
  %90 = vmatprep.subr.mxu0 0.0
  %91 = vmatpush1.msra.mxu0 0.0
  %92 = vmatprep.subr.mxu0 0.0
  %93 = vmatpush1.msra.mxu0 0.0
  %94 = vmatprep.subr.mxu0 0.0
  %95 = vmatpush1.msra.mxu0 0.0
  %96 = vmatprep.subr.mxu0 0.0
  %97 = vmatpush1.msra.mxu0 0.0
  %98 = vmatprep.subr.mxu0 0.0
  %99 = vmatpush1.msra.mxu0 0.0
  %100 = vmatprep.subr.mxu0 0.0
  %101 = vmatpush1.msra.mxu0 0.0
  %102 = vmatprep.subr.mxu0 0.0
  %103 = vmatpush1.msra.mxu0 0.0
  %104 = vmatprep.subr.mxu0 0.0
  %105 = vmatpush1.msra.mxu0 0.0
  %106 = vmatprep.subr.mxu0 0.0
  %107 = vmatpush1.msra.mxu0 0.0
  %108 = vmatprep.subr.mxu0 0.0
  %109 = vmatpush1.msra.mxu0 0.0
  %110 = vmatprep.subr.mxu0 0.0
  %111 = vmatpush1.msra.mxu0 0.0
  %112 = vmatprep.mubr.f32.mxu0 0.0
  %v113 = vand.u32 %v42, 4294901760
  %v114 = vsub.f32 %v42, %v113
  %v115 = vand.u32 %v114, 4294901760
  %v116 = vsub.f32 %v114, %v115
  %v117 = vand.u32 %v116, 4294901760
  %118 = vmatmul.mubr.f32.gmra.mrb[0].mxu0 %v117
  %v119 = vpop.f32.mrb[0].mxu0
  %v120 = vadd.f32 %v38, %v119
  %v121 = vpop.f32.mrb[0].mxu0
  %122 = vdwg.mxu0
  %123 = vmatprep.subr.mxu0 0.0
  %v124 = vand.u32 %v29, 4294901760
  %v125 = vsub.f32 %v29, %v124
  %v126 = vand.u32 %v125, 4294901760
  %v127 = vsub.f32 %v125, %v126
  %v128 = vand.u32 %v127, 4294901760
  %129 = vmatpush1.msra.mxu0 %v128
  %130 = vmatprep.subr.mxu0 0.0
  %v131 = vand.u32 %v30, 4294901760
  %v132 = vsub.f32 %v30, %v131
  %v133 = vand.u32 %v132, 4294901760
  %v134 = vsub.f32 %v132, %v133
  %v135 = vand.u32 %v134, 4294901760
  %136 = vmatpush1.msra.mxu0 %v135
  %137 = vmatprep.subr.mxu0 0.0
  %v138 = vand.u32 %v31, 4294901760
  %v139 = vsub.f32 %v31, %v138
  %v140 = vand.u32 %v139, 4294901760
  %v141 = vsub.f32 %v139, %v140
  %v142 = vand.u32 %v141, 4294901760
  %143 = vmatpush1.msra.mxu0 %v142
  %144 = vmatprep.subr.mxu0 0.0
  %v145 = vand.u32 %v32, 4294901760
  %v146 = vsub.f32 %v32, %v145
  %v147 = vand.u32 %v146, 4294901760
  %v148 = vsub.f32 %v146, %v147
  %v149 = vand.u32 %v148, 4294901760
  %150 = vmatpush1.msra.mxu0 %v149
  %151 = vmatprep.subr.mxu0 0.0
  %152 = vmatpush1.msra.mxu0 0.0
  %153 = vmatprep.subr.mxu0 0.0
  %154 = vmatpush1.msra.mxu0 0.0
  %155 = vmatprep.subr.mxu0 0.0
  %156 = vmatpush1.msra.mxu0 0.0
  %157 = vmatprep.subr.mxu0 0.0
  %158 = vmatpush1.msra.mxu0 0.0
  %159 = vmatprep.subr.mxu0 0.0
  %160 = vmatpush1.msra.mxu0 0.0
  %161 = vmatprep.subr.mxu0 0.0
  %162 = vmatpush1.msra.mxu0 0.0
  %163 = vmatprep.subr.mxu0 0.0
  %164 = vmatpush1.msra.mxu0 0.0
  %165 = vmatprep.subr.mxu0 0.0
  %166 = vmatpush1.msra.mxu0 0.0
  %167 = vmatprep.subr.mxu0 0.0
  %168 = vmatpush1.msra.mxu0 0.0
  %169 = vmatprep.subr.mxu0 0.0
  %170 = vmatpush1.msra.mxu0 0.0
  %171 = vmatprep.subr.mxu0 0.0
  %172 = vmatpush1.msra.mxu0 0.0
  %173 = vmatprep.subr.mxu0 0.0
  %174 = vmatpush1.msra.mxu0 0.0
  %175 = vmatprep.subr.mxu0 0.0
  %176 = vmatpush1.msra.mxu0 0.0
  %177 = vmatprep.subr.mxu0 0.0
  %178 = vmatpush1.msra.mxu0 0.0
  %179 = vmatprep.subr.mxu0 0.0
  %180 = vmatpush1.msra.mxu0 0.0
  %181 = vmatprep.subr.mxu0 0.0
  %182 = vmatpush1.msra.mxu0 0.0
  %183 = vmatprep.subr.mxu0 0.0
  %184 = vmatpush1.msra.mxu0 0.0
  %185 = vmatprep.subr.mxu0 0.0
  %186 = vmatpush1.msra.mxu0 0.0
  %187 = vmatprep.subr.mxu0 0.0
  %188 = vmatpush1.msra.mxu0 0.0
  %189 = vmatprep.subr.mxu0 0.0
  %190 = vmatpush1.msra.mxu0 0.0
  %191 = vmatprep.subr.mxu0 0.0
  %192 = vmatpush1.msra.mxu0 0.0
  %193 = vmatprep.subr.mxu0 0.0
  %194 = vmatpush1.msra.mxu0 0.0
  %195 = vmatprep.subr.mxu0 0.0
  %196 = vmatpush1.msra.mxu0 0.0
  %197 = vmatprep.subr.mxu0 0.0
  %198 = vmatpush1.msra.mxu0 0.0
  %199 = vmatprep.subr.mxu0 0.0
  %200 = vmatpush1.msra.mxu0 0.0
  %201 = vmatprep.subr.mxu0 0.0
  %202 = vmatpush1.msra.mxu0 0.0
  %203 = vmatprep.subr.mxu0 0.0
  %204 = vmatpush1.msra.mxu0 0.0
  %205 = vmatprep.subr.mxu0 0.0
  %206 = vmatpush1.msra.mxu0 0.0
  %207 = vmatprep.mubr.f32.mxu0 0.0
  %v208 = vand.u32 %v42, 4294901760
  %209 = vmatmul.mubr.f32.gmra.mrb[0].mxu0 %v208
  %v210 = vpop.f32.mrb[0].mxu0
  %v211 = vadd.f32 %v120, %v210
  %v212 = vpop.f32.mrb[0].mxu0
  %213 = vdwg.mxu0
  %214 = vmatprep.subr.mxu0 0.0
  %v215 = vand.u32 %v29, 4294901760
  %v216 = vsub.f32 %v29, %v215
  %217 = vmatpush1.msra.mxu0 %v216
  %218 = vmatprep.subr.mxu0 0.0
  %v219 = vand.u32 %v30, 4294901760
  %v220 = vsub.f32 %v30, %v219
  %221 = vmatpush1.msra.mxu0 %v220
  %222 = vmatprep.subr.mxu0 0.0
  %v223 = vand.u32 %v31, 4294901760
  %v224 = vsub.f32 %v31, %v223
  %225 = vmatpush1.msra.mxu0 %v224
  %226 = vmatprep.subr.mxu0 0.0
  %v227 = vand.u32 %v32, 4294901760
  %v228 = vsub.f32 %v32, %v227
  %229 = vmatpush1.msra.mxu0 %v228
  %230 = vmatprep.subr.mxu0 0.0
  %231 = vmatpush1.msra.mxu0 0.0
  %232 = vmatprep.subr.mxu0 0.0
  %233 = vmatpush1.msra.mxu0 0.0
  %234 = vmatprep.subr.mxu0 0.0
  %235 = vmatpush1.msra.mxu0 0.0
  %236 = vmatprep.subr.mxu0 0.0
  %237 = vmatpush1.msra.mxu0 0.0
  %238 = vmatprep.subr.mxu0 0.0
  %239 = vmatpush1.msra.mxu0 0.0
  %240 = vmatprep.subr.mxu0 0.0
  %241 = vmatpush1.msra.mxu0 0.0
  %242 = vmatprep.subr.mxu0 0.0
  %243 = vmatpush1.msra.mxu0 0.0
  %244 = vmatprep.subr.mxu0 0.0
  %245 = vmatpush1.msra.mxu0 0.0
  %246 = vmatprep.subr.mxu0 0.0
  %247 = vmatpush1.msra.mxu0 0.0
  %248 = vmatprep.subr.mxu0 0.0
  %249 = vmatpush1.msra.mxu0 0.0
  %250 = vmatprep.subr.mxu0 0.0
  %251 = vmatpush1.msra.mxu0 0.0
  %252 = vmatprep.subr.mxu0 0.0
  %253 = vmatpush1.msra.mxu0 0.0
  %254 = vmatprep.subr.mxu0 0.0
  %255 = vmatpush1.msra.mxu0 0.0
  %256 = vmatprep.subr.mxu0 0.0
  %257 = vmatpush1.msra.mxu0 0.0
  %258 = vmatprep.subr.mxu0 0.0
  %259 = vmatpush1.msra.mxu0 0.0
  %260 = vmatprep.subr.mxu0 0.0
  %261 = vmatpush1.msra.mxu0 0.0
  %262 = vmatprep.subr.mxu0 0.0
  %263 = vmatpush1.msra.mxu0 0.0
  %264 = vmatprep.subr.mxu0 0.0
  %265 = vmatpush1.msra.mxu0 0.0
  %266 = vmatprep.subr.mxu0 0.0
  %267 = vmatpush1.msra.mxu0 0.0
  %268 = vmatprep.subr.mxu0 0.0
  %269 = vmatpush1.msra.mxu0 0.0
  %270 = vmatprep.subr.mxu0 0.0
  %271 = vmatpush1.msra.mxu0 0.0
  %272 = vmatprep.subr.mxu0 0.0
  %273 = vmatpush1.msra.mxu0 0.0
  %274 = vmatprep.subr.mxu0 0.0
  %275 = vmatpush1.msra.mxu0 0.0
  %276 = vmatprep.subr.mxu0 0.0
  %277 = vmatpush1.msra.mxu0 0.0
  %278 = vmatprep.subr.mxu0 0.0
  %279 = vmatpush1.msra.mxu0 0.0
  %280 = vmatprep.subr.mxu0 0.0
  %281 = vmatpush1.msra.mxu0 0.0
  %282 = vmatprep.subr.mxu0 0.0
  %283 = vmatpush1.msra.mxu0 0.0
  %284 = vmatprep.subr.mxu0 0.0
  %285 = vmatpush1.msra.mxu0 0.0
  %286 = vmatprep.mubr.f32.mxu0 0.0
  %v287 = vand.u32 %v42, 4294901760
  %v288 = vsub.f32 %v42, %v287
  %289 = vmatmul.mubr.f32.gmra.mrb[0].mxu0 %v288
  %v290 = vpop.f32.mrb[0].mxu0
  %v291 = vadd.f32 %v211, %v290
  %v292 = vpop.f32.mrb[0].mxu0
  %293 = vdwg.mxu0
  %294 = vmatprep.subr.mxu0 0.0
  %v295 = vand.u32 %v29, 4294901760
  %296 = vmatpush1.msra.mxu0 %v295
  %297 = vmatprep.subr.mxu0 0.0
  %v298 = vand.u32 %v30, 4294901760
  %299 = vmatpush1.msra.mxu0 %v298
  %300 = vmatprep.subr.mxu0 0.0
  %v301 = vand.u32 %v31, 4294901760
  %302 = vmatpush1.msra.mxu0 %v301
  %303 = vmatprep.subr.mxu0 0.0
  %v304 = vand.u32 %v32, 4294901760
  %305 = vmatpush1.msra.mxu0 %v304
  %306 = vmatprep.subr.mxu0 0.0
  %307 = vmatpush1.msra.mxu0 0.0
  %308 = vmatprep.subr.mxu0 0.0
  %309 = vmatpush1.msra.mxu0 0.0
  %310 = vmatprep.subr.mxu0 0.0
  %311 = vmatpush1.msra.mxu0 0.0
  %312 = vmatprep.subr.mxu0 0.0
  %313 = vmatpush1.msra.mxu0 0.0
  %314 = vmatprep.subr.mxu0 0.0
  %315 = vmatpush1.msra.mxu0 0.0
  %316 = vmatprep.subr.mxu0 0.0
  %317 = vmatpush1.msra.mxu0 0.0
  %318 = vmatprep.subr.mxu0 0.0
  %319 = vmatpush1.msra.mxu0 0.0
  %320 = vmatprep.subr.mxu0 0.0
  %321 = vmatpush1.msra.mxu0 0.0
  %322 = vmatprep.subr.mxu0 0.0
  %323 = vmatpush1.msra.mxu0 0.0
  %324 = vmatprep.subr.mxu0 0.0
  %325 = vmatpush1.msra.mxu0 0.0
  %326 = vmatprep.subr.mxu0 0.0
  %327 = vmatpush1.msra.mxu0 0.0
  %328 = vmatprep.subr.mxu0 0.0
  %329 = vmatpush1.msra.mxu0 0.0
  %330 = vmatprep.subr.mxu0 0.0
  %331 = vmatpush1.msra.mxu0 0.0
  %332 = vmatprep.subr.mxu0 0.0
  %333 = vmatpush1.msra.mxu0 0.0
  %334 = vmatprep.subr.mxu0 0.0
  %335 = vmatpush1.msra.mxu0 0.0
  %336 = vmatprep.subr.mxu0 0.0
  %337 = vmatpush1.msra.mxu0 0.0
  %338 = vmatprep.subr.mxu0 0.0
  %339 = vmatpush1.msra.mxu0 0.0
  %340 = vmatprep.subr.mxu0 0.0
  %341 = vmatpush1.msra.mxu0 0.0
  %342 = vmatprep.subr.mxu0 0.0
  %343 = vmatpush1.msra.mxu0 0.0
  %344 = vmatprep.subr.mxu0 0.0
  %345 = vmatpush1.msra.mxu0 0.0
  %346 = vmatprep.subr.mxu0 0.0
  %347 = vmatpush1.msra.mxu0 0.0
  %348 = vmatprep.subr.mxu0 0.0
  %349 = vmatpush1.msra.mxu0 0.0
  %350 = vmatprep.subr.mxu0 0.0
  %351 = vmatpush1.msra.mxu0 0.0
  %352 = vmatprep.subr.mxu0 0.0
  %353 = vmatpush1.msra.mxu0 0.0
  %354 = vmatprep.subr.mxu0 0.0
  %355 = vmatpush1.msra.mxu0 0.0
  %356 = vmatprep.subr.mxu0 0.0
  %357 = vmatpush1.msra.mxu0 0.0
  %358 = vmatprep.subr.mxu0 0.0
  %359 = vmatpush1.msra.mxu0 0.0
  %360 = vmatprep.subr.mxu0 0.0
  %361 = vmatpush1.msra.mxu0 0.0
  %362 = vmatprep.mubr.f32.mxu0 0.0
  %v363 = vand.u32 %v42, 4294901760
  %v364 = vsub.f32 %v42, %v363
  %v365 = vand.u32 %v364, 4294901760
  %366 = vmatmul.mubr.f32.gmra.mrb[0].mxu0 %v365
  %v367 = vpop.f32.mrb[0].mxu0
  %v368 = vadd.f32 %v291, %v367
  %v369 = vpop.f32.mrb[0].mxu0
  %370 = vdwg.mxu0
  %371 = vmatprep.subr.mxu0 0.0
  %v372 = vand.u32 %v29, 4294901760
  %v373 = vsub.f32 %v29, %v372
  %v374 = vand.u32 %v373, 4294901760
  %375 = vmatpush1.msra.mxu0 %v374
  %376 = vmatprep.subr.mxu0 0.0
  %v377 = vand.u32 %v30, 4294901760
  %v378 = vsub.f32 %v30, %v377
  %v379 = vand.u32 %v378, 4294901760
  %380 = vmatpush1.msra.mxu0 %v379
  %381 = vmatprep.subr.mxu0 0.0
  %v382 = vand.u32 %v31, 4294901760
  %v383 = vsub.f32 %v31, %v382
  %v384 = vand.u32 %v383, 4294901760
  %385 = vmatpush1.msra.mxu0 %v384
  %386 = vmatprep.subr.mxu0 0.0
  %v387 = vand.u32 %v32, 4294901760
  %v388 = vsub.f32 %v32, %v387
  %v389 = vand.u32 %v388, 4294901760
  %390 = vmatpush1.msra.mxu0 %v389
  %391 = vmatprep.subr.mxu0 0.0
  %392 = vmatpush1.msra.mxu0 0.0
  %393 = vmatprep.subr.mxu0 0.0
  %394 = vmatpush1.msra.mxu0 0.0
  %395 = vmatprep.subr.mxu0 0.0
  %396 = vmatpush1.msra.mxu0 0.0
  %397 = vmatprep.subr.mxu0 0.0
  %398 = vmatpush1.msra.mxu0 0.0
  %399 = vmatprep.subr.mxu0 0.0
  %400 = vmatpush1.msra.mxu0 0.0
  %401 = vmatprep.subr.mxu0 0.0
  %402 = vmatpush1.msra.mxu0 0.0
  %403 = vmatprep.subr.mxu0 0.0
  %404 = vmatpush1.msra.mxu0 0.0
  %405 = vmatprep.subr.mxu0 0.0
  %406 = vmatpush1.msra.mxu0 0.0
  %407 = vmatprep.subr.mxu0 0.0
  %408 = vmatpush1.msra.mxu0 0.0
  %409 = vmatprep.subr.mxu0 0.0
  %410 = vmatpush1.msra.mxu0 0.0
  %411 = vmatprep.subr.mxu0 0.0
  %412 = vmatpush1.msra.mxu0 0.0
  %413 = vmatprep.subr.mxu0 0.0
  %414 = vmatpush1.msra.mxu0 0.0
  %415 = vmatprep.subr.mxu0 0.0
  %416 = vmatpush1.msra.mxu0 0.0
  %417 = vmatprep.subr.mxu0 0.0
  %418 = vmatpush1.msra.mxu0 0.0
  %419 = vmatprep.subr.mxu0 0.0
  %420 = vmatpush1.msra.mxu0 0.0
  %421 = vmatprep.subr.mxu0 0.0
  %422 = vmatpush1.msra.mxu0 0.0
  %423 = vmatprep.subr.mxu0 0.0
  %424 = vmatpush1.msra.mxu0 0.0
  %425 = vmatprep.subr.mxu0 0.0
  %426 = vmatpush1.msra.mxu0 0.0
  %427 = vmatprep.subr.mxu0 0.0
  %428 = vmatpush1.msra.mxu0 0.0
  %429 = vmatprep.subr.mxu0 0.0
  %430 = vmatpush1.msra.mxu0 0.0
  %431 = vmatprep.subr.mxu0 0.0
  %432 = vmatpush1.msra.mxu0 0.0
  %433 = vmatprep.subr.mxu0 0.0
  %434 = vmatpush1.msra.mxu0 0.0
  %435 = vmatprep.subr.mxu0 0.0
  %436 = vmatpush1.msra.mxu0 0.0
  %437 = vmatprep.subr.mxu0 0.0
  %438 = vmatpush1.msra.mxu0 0.0
  %439 = vmatprep.subr.mxu0 0.0
  %440 = vmatpush1.msra.mxu0 0.0
  %441 = vmatprep.subr.mxu0 0.0
  %442 = vmatpush1.msra.mxu0 0.0
  %443 = vmatprep.subr.mxu0 0.0
  %444 = vmatpush1.msra.mxu0 0.0
  %445 = vmatprep.subr.mxu0 0.0
  %446 = vmatpush1.msra.mxu0 0.0
  %447 = vmatprep.mubr.f32.mxu0 0.0
  %v448 = vand.u32 %v42, 4294901760
  %449 = vmatmul.mubr.f32.gmra.mrb[0].mxu0 %v448
  %v450 = vpop.f32.mrb[0].mxu0
  %v451 = vadd.f32 %v368, %v450
  %v452 = vpop.f32.mrb[0].mxu0
  %453 = vdwg.mxu0
  %454 = vmatprep.subr.mxu0 0.0
  %v455 = vand.u32 %v29, 4294901760
  %456 = vmatpush1.msra.mxu0 %v455
  %457 = vmatprep.subr.mxu0 0.0
  %v458 = vand.u32 %v30, 4294901760
  %459 = vmatpush1.msra.mxu0 %v458
  %460 = vmatprep.subr.mxu0 0.0
  %v461 = vand.u32 %v31, 4294901760
  %462 = vmatpush1.msra.mxu0 %v461
  %463 = vmatprep.subr.mxu0 0.0
  %v464 = vand.u32 %v32, 4294901760
  %465 = vmatpush1.msra.mxu0 %v464
  %466 = vmatprep.subr.mxu0 0.0
  %467 = vmatpush1.msra.mxu0 0.0
  %468 = vmatprep.subr.mxu0 0.0
  %469 = vmatpush1.msra.mxu0 0.0
  %470 = vmatprep.subr.mxu0 0.0
  %471 = vmatpush1.msra.mxu0 0.0
  %472 = vmatprep.subr.mxu0 0.0
  %473 = vmatpush1.msra.mxu0 0.0
  %474 = vmatprep.subr.mxu0 0.0
  %475 = vmatpush1.msra.mxu0 0.0
  %476 = vmatprep.subr.mxu0 0.0
  %477 = vmatpush1.msra.mxu0 0.0
  %478 = vmatprep.subr.mxu0 0.0
  %479 = vmatpush1.msra.mxu0 0.0
  %480 = vmatprep.subr.mxu0 0.0
  %481 = vmatpush1.msra.mxu0 0.0
  %482 = vmatprep.subr.mxu0 0.0
  %483 = vmatpush1.msra.mxu0 0.0
  %484 = vmatprep.subr.mxu0 0.0
  %485 = vmatpush1.msra.mxu0 0.0
  %486 = vmatprep.subr.mxu0 0.0
  %487 = vmatpush1.msra.mxu0 0.0
  %488 = vmatprep.subr.mxu0 0.0
  %489 = vmatpush1.msra.mxu0 0.0
  %490 = vmatprep.subr.mxu0 0.0
  %491 = vmatpush1.msra.mxu0 0.0
  %492 = vmatprep.subr.mxu0 0.0
  %493 = vmatpush1.msra.mxu0 0.0
  %494 = vmatprep.subr.mxu0 0.0
  %495 = vmatpush1.msra.mxu0 0.0
  %496 = vmatprep.subr.mxu0 0.0
  %497 = vmatpush1.msra.mxu0 0.0
  %498 = vmatprep.subr.mxu0 0.0
  %499 = vmatpush1.msra.mxu0 0.0
  %500 = vmatprep.subr.mxu0 0.0
  %501 = vmatpush1.msra.mxu0 0.0
  %502 = vmatprep.subr.mxu0 0.0
  %503 = vmatpush1.msra.mxu0 0.0
  %504 = vmatprep.subr.mxu0 0.0
  %505 = vmatpush1.msra.mxu0 0.0
  %506 = vmatprep.subr.mxu0 0.0
  %507 = vmatpush1.msra.mxu0 0.0
  %508 = vmatprep.subr.mxu0 0.0
  %509 = vmatpush1.msra.mxu0 0.0
  %510 = vmatprep.subr.mxu0 0.0
  %511 = vmatpush1.msra.mxu0 0.0
  %512 = vmatprep.subr.mxu0 0.0
  %513 = vmatpush1.msra.mxu0 0.0
  %514 = vmatprep.subr.mxu0 0.0
  %515 = vmatpush1.msra.mxu0 0.0
  %516 = vmatprep.subr.mxu0 0.0
  %517 = vmatpush1.msra.mxu0 0.0
  %518 = vmatprep.subr.mxu0 0.0
  %519 = vmatpush1.msra.mxu0 0.0
  %520 = vmatprep.subr.mxu0 0.0
  %521 = vmatpush1.msra.mxu0 0.0
  %522 = vmatprep.mubr.f32.mxu0 0.0
  %v523 = vand.u32 %v42, 4294901760
  %524 = vmatmul.mubr.f32.gmra.mrb[0].mxu0 %v523
  %v525 = vpop.f32.mrb[0].mxu0
  %v526 = vadd.f32 %v451, %v525
  %v527 = vpop.f32.mrb[0].mxu0
  %528 = vdwg.mxu0
  %v529 = vmax.f32 %v526, 0.0
  %v530 = vld [vmem:[%s3] sm:$0xff]
  %v531 = vld [vmem:[%s3 + $0x8] sm:$0xff]
  %v532 = vld [vmem:[%s3 + $0x10] sm:$0xff]
  %v533 = vld [vmem:[%s3 + $0x18] sm:$0xff]
  %v534 = vld [vmem:[%s4] sm:$0x1]
  %v536 = vlaneseq
  %v537 = vshrl.u32 %v536, 7
  %v538 = vsub.s32 0, %v537
  %v539 = vrot.slane %v534, %v538
  %v542 = vsel %vm40, %v529, 0
  %544 = vmatprep.subr.mxu0 0.0
  %v545 = vand.u32 %v530, 4294901760
  %546 = vmatpush1.msra.mxu0 %v545
  %547 = vmatprep.subr.mxu0 0.0
  %v548 = vand.u32 %v531, 4294901760
  %549 = vmatpush1.msra.mxu0 %v548
  %550 = vmatprep.subr.mxu0 0.0
  %v551 = vand.u32 %v532, 4294901760
  %552 = vmatpush1.msra.mxu0 %v551
  %553 = vmatprep.subr.mxu0 0.0
  %v554 = vand.u32 %v533, 4294901760
  %555 = vmatpush1.msra.mxu0 %v554
  %556 = vmatprep.subr.mxu0 0.0
  %557 = vmatpush1.msra.mxu0 0.0
  %558 = vmatprep.subr.mxu0 0.0
  %559 = vmatpush1.msra.mxu0 0.0
  %560 = vmatprep.subr.mxu0 0.0
  %561 = vmatpush1.msra.mxu0 0.0
  %562 = vmatprep.subr.mxu0 0.0
  %563 = vmatpush1.msra.mxu0 0.0
  %564 = vmatprep.subr.mxu0 0.0
  %565 = vmatpush1.msra.mxu0 0.0
  %566 = vmatprep.subr.mxu0 0.0
  %567 = vmatpush1.msra.mxu0 0.0
  %568 = vmatprep.subr.mxu0 0.0
  %569 = vmatpush1.msra.mxu0 0.0
  %570 = vmatprep.subr.mxu0 0.0
  %571 = vmatpush1.msra.mxu0 0.0
  %572 = vmatprep.subr.mxu0 0.0
  %573 = vmatpush1.msra.mxu0 0.0
  %574 = vmatprep.subr.mxu0 0.0
  %575 = vmatpush1.msra.mxu0 0.0
  %576 = vmatprep.subr.mxu0 0.0
  %577 = vmatpush1.msra.mxu0 0.0
  %578 = vmatprep.subr.mxu0 0.0
  %579 = vmatpush1.msra.mxu0 0.0
  %580 = vmatprep.subr.mxu0 0.0
  %581 = vmatpush1.msra.mxu0 0.0
  %582 = vmatprep.subr.mxu0 0.0
  %583 = vmatpush1.msra.mxu0 0.0
  %584 = vmatprep.subr.mxu0 0.0
  %585 = vmatpush1.msra.mxu0 0.0
  %586 = vmatprep.subr.mxu0 0.0
  %587 = vmatpush1.msra.mxu0 0.0
  %588 = vmatprep.subr.mxu0 0.0
  %589 = vmatpush1.msra.mxu0 0.0
  %590 = vmatprep.subr.mxu0 0.0
  %591 = vmatpush1.msra.mxu0 0.0
  %592 = vmatprep.subr.mxu0 0.0
  %593 = vmatpush1.msra.mxu0 0.0
  %594 = vmatprep.subr.mxu0 0.0
  %595 = vmatpush1.msra.mxu0 0.0
  %596 = vmatprep.subr.mxu0 0.0
  %597 = vmatpush1.msra.mxu0 0.0
  %598 = vmatprep.subr.mxu0 0.0
  %599 = vmatpush1.msra.mxu0 0.0
  %600 = vmatprep.subr.mxu0 0.0
  %601 = vmatpush1.msra.mxu0 0.0
  %602 = vmatprep.subr.mxu0 0.0
  %603 = vmatpush1.msra.mxu0 0.0
  %604 = vmatprep.subr.mxu0 0.0
  %605 = vmatpush1.msra.mxu0 0.0
  %606 = vmatprep.subr.mxu0 0.0
  %607 = vmatpush1.msra.mxu0 0.0
  %608 = vmatprep.subr.mxu0 0.0
  %609 = vmatpush1.msra.mxu0 0.0
  %610 = vmatprep.subr.mxu0 0.0
  %611 = vmatpush1.msra.mxu0 0.0
  %612 = vmatprep.mubr.f32.mxu0 0.0
  %v613 = vand.u32 %v542, 4294901760
  %v614 = vsub.f32 %v542, %v613
  %v615 = vand.u32 %v614, 4294901760
  %v616 = vsub.f32 %v614, %v615
  %v617 = vand.u32 %v616, 4294901760
  %618 = vmatmul.mubr.f32.gmra.mrb[0].mxu0 %v617
  %v619 = vpop.f32.mrb[0].mxu0
  %v620 = vadd.f32 %v539, %v619
  %v621 = vpop.f32.mrb[0].mxu0
  %622 = vdwg.mxu0
  %623 = vmatprep.subr.mxu0 0.0
  %v624 = vand.u32 %v530, 4294901760
  %v625 = vsub.f32 %v530, %v624
  %v626 = vand.u32 %v625, 4294901760
  %v627 = vsub.f32 %v625, %v626
  %v628 = vand.u32 %v627, 4294901760
  %629 = vmatpush1.msra.mxu0 %v628
  %630 = vmatprep.subr.mxu0 0.0
  %v631 = vand.u32 %v531, 4294901760
  %v632 = vsub.f32 %v531, %v631
  %v633 = vand.u32 %v632, 4294901760
  %v634 = vsub.f32 %v632, %v633
  %v635 = vand.u32 %v634, 4294901760
  %636 = vmatpush1.msra.mxu0 %v635
  %637 = vmatprep.subr.mxu0 0.0
  %v638 = vand.u32 %v532, 4294901760
  %v639 = vsub.f32 %v532, %v638
  %v640 = vand.u32 %v639, 4294901760
  %v641 = vsub.f32 %v639, %v640
  %v642 = vand.u32 %v641, 4294901760
  %643 = vmatpush1.msra.mxu0 %v642
  %644 = vmatprep.subr.mxu0 0.0
  %v645 = vand.u32 %v533, 4294901760
  %v646 = vsub.f32 %v533, %v645
  %v647 = vand.u32 %v646, 4294901760
  %v648 = vsub.f32 %v646, %v647
  %v649 = vand.u32 %v648, 4294901760
  %650 = vmatpush1.msra.mxu0 %v649
  %651 = vmatprep.subr.mxu0 0.0
  %652 = vmatpush1.msra.mxu0 0.0
  %653 = vmatprep.subr.mxu0 0.0
  %654 = vmatpush1.msra.mxu0 0.0
  %655 = vmatprep.subr.mxu0 0.0
  %656 = vmatpush1.msra.mxu0 0.0
  %657 = vmatprep.subr.mxu0 0.0
  %658 = vmatpush1.msra.mxu0 0.0
  %659 = vmatprep.subr.mxu0 0.0
  %660 = vmatpush1.msra.mxu0 0.0
  %661 = vmatprep.subr.mxu0 0.0
  %662 = vmatpush1.msra.mxu0 0.0
  %663 = vmatprep.subr.mxu0 0.0
  %664 = vmatpush1.msra.mxu0 0.0
  %665 = vmatprep.subr.mxu0 0.0
  %666 = vmatpush1.msra.mxu0 0.0
  %667 = vmatprep.subr.mxu0 0.0
  %668 = vmatpush1.msra.mxu0 0.0
  %669 = vmatprep.subr.mxu0 0.0
  %670 = vmatpush1.msra.mxu0 0.0
  %671 = vmatprep.subr.mxu0 0.0
  %672 = vmatpush1.msra.mxu0 0.0
  %673 = vmatprep.subr.mxu0 0.0
  %674 = vmatpush1.msra.mxu0 0.0
  %675 = vmatprep.subr.mxu0 0.0
  %676 = vmatpush1.msra.mxu0 0.0
  %677 = vmatprep.subr.mxu0 0.0
  %678 = vmatpush1.msra.mxu0 0.0
  %679 = vmatprep.subr.mxu0 0.0
  %680 = vmatpush1.msra.mxu0 0.0
  %681 = vmatprep.subr.mxu0 0.0
  %682 = vmatpush1.msra.mxu0 0.0
  %683 = vmatprep.subr.mxu0 0.0
  %684 = vmatpush1.msra.mxu0 0.0
  %685 = vmatprep.subr.mxu0 0.0
  %686 = vmatpush1.msra.mxu0 0.0
  %687 = vmatprep.subr.mxu0 0.0
  %688 = vmatpush1.msra.mxu0 0.0
  %689 = vmatprep.subr.mxu0 0.0
  %690 = vmatpush1.msra.mxu0 0.0
  %691 = vmatprep.subr.mxu0 0.0
  %692 = vmatpush1.msra.mxu0 0.0
  %693 = vmatprep.subr.mxu0 0.0
  %694 = vmatpush1.msra.mxu0 0.0
  %695 = vmatprep.subr.mxu0 0.0
  %696 = vmatpush1.msra.mxu0 0.0
  %697 = vmatprep.subr.mxu0 0.0
  %698 = vmatpush1.msra.mxu0 0.0
  %699 = vmatprep.subr.mxu0 0.0
  %700 = vmatpush1.msra.mxu0 0.0
  %701 = vmatprep.subr.mxu0 0.0
  %702 = vmatpush1.msra.mxu0 0.0
  %703 = vmatprep.subr.mxu0 0.0
  %704 = vmatpush1.msra.mxu0 0.0
  %705 = vmatprep.subr.mxu0 0.0
  %706 = vmatpush1.msra.mxu0 0.0
  %707 = vmatprep.mubr.f32.mxu0 0.0
  %v708 = vand.u32 %v542, 4294901760
  %709 = vmatmul.mubr.f32.gmra.mrb[0].mxu0 %v708
  %v710 = vpop.f32.mrb[0].mxu0
  %v711 = vadd.f32 %v620, %v710
  %v712 = vpop.f32.mrb[0].mxu0
  %713 = vdwg.mxu0
  %714 = vmatprep.subr.mxu0 0.0
  %v715 = vand.u32 %v530, 4294901760
  %v716 = vsub.f32 %v530, %v715
  %717 = vmatpush1.msra.mxu0 %v716
  %718 = vmatprep.subr.mxu0 0.0
  %v719 = vand.u32 %v531, 4294901760
  %v720 = vsub.f32 %v531, %v719
  %721 = vmatpush1.msra.mxu0 %v720
  %722 = vmatprep.subr.mxu0 0.0
  %v723 = vand.u32 %v532, 4294901760
  %v724 = vsub.f32 %v532, %v723
  %725 = vmatpush1.msra.mxu0 %v724
  %726 = vmatprep.subr.mxu0 0.0
  %v727 = vand.u32 %v533, 4294901760
  %v728 = vsub.f32 %v533, %v727
  %729 = vmatpush1.msra.mxu0 %v728
  %730 = vmatprep.subr.mxu0 0.0
  %731 = vmatpush1.msra.mxu0 0.0
  %732 = vmatprep.subr.mxu0 0.0
  %733 = vmatpush1.msra.mxu0 0.0
  %734 = vmatprep.subr.mxu0 0.0
  %735 = vmatpush1.msra.mxu0 0.0
  %736 = vmatprep.subr.mxu0 0.0
  %737 = vmatpush1.msra.mxu0 0.0
  %738 = vmatprep.subr.mxu0 0.0
  %739 = vmatpush1.msra.mxu0 0.0
  %740 = vmatprep.subr.mxu0 0.0
  %741 = vmatpush1.msra.mxu0 0.0
  %742 = vmatprep.subr.mxu0 0.0
  %743 = vmatpush1.msra.mxu0 0.0
  %744 = vmatprep.subr.mxu0 0.0
  %745 = vmatpush1.msra.mxu0 0.0
  %746 = vmatprep.subr.mxu0 0.0
  %747 = vmatpush1.msra.mxu0 0.0
  %748 = vmatprep.subr.mxu0 0.0
  %749 = vmatpush1.msra.mxu0 0.0
  %750 = vmatprep.subr.mxu0 0.0
  %751 = vmatpush1.msra.mxu0 0.0
  %752 = vmatprep.subr.mxu0 0.0
  %753 = vmatpush1.msra.mxu0 0.0
  %754 = vmatprep.subr.mxu0 0.0
  %755 = vmatpush1.msra.mxu0 0.0
  %756 = vmatprep.subr.mxu0 0.0
  %757 = vmatpush1.msra.mxu0 0.0
  %758 = vmatprep.subr.mxu0 0.0
  %759 = vmatpush1.msra.mxu0 0.0
  %760 = vmatprep.subr.mxu0 0.0
  %761 = vmatpush1.msra.mxu0 0.0
  %762 = vmatprep.subr.mxu0 0.0
  %763 = vmatpush1.msra.mxu0 0.0
  %764 = vmatprep.subr.mxu0 0.0
  %765 = vmatpush1.msra.mxu0 0.0
  %766 = vmatprep.subr.mxu0 0.0
  %767 = vmatpush1.msra.mxu0 0.0
  %768 = vmatprep.subr.mxu0 0.0
  %769 = vmatpush1.msra.mxu0 0.0
  %770 = vmatprep.subr.mxu0 0.0
  %771 = vmatpush1.msra.mxu0 0.0
  %772 = vmatprep.subr.mxu0 0.0
  %773 = vmatpush1.msra.mxu0 0.0
  %774 = vmatprep.subr.mxu0 0.0
  %775 = vmatpush1.msra.mxu0 0.0
  %776 = vmatprep.subr.mxu0 0.0
  %777 = vmatpush1.msra.mxu0 0.0
  %778 = vmatprep.subr.mxu0 0.0
  %779 = vmatpush1.msra.mxu0 0.0
  %780 = vmatprep.subr.mxu0 0.0
  %781 = vmatpush1.msra.mxu0 0.0
  %782 = vmatprep.subr.mxu0 0.0
  %783 = vmatpush1.msra.mxu0 0.0
  %784 = vmatprep.subr.mxu0 0.0
  %785 = vmatpush1.msra.mxu0 0.0
  %786 = vmatprep.mubr.f32.mxu0 0.0
  %v787 = vand.u32 %v542, 4294901760
  %v788 = vsub.f32 %v542, %v787
  %789 = vmatmul.mubr.f32.gmra.mrb[0].mxu0 %v788
  %v790 = vpop.f32.mrb[0].mxu0
  %v791 = vadd.f32 %v711, %v790
  %v792 = vpop.f32.mrb[0].mxu0
  %793 = vdwg.mxu0
  %794 = vmatprep.subr.mxu0 0.0
  %v795 = vand.u32 %v530, 4294901760
  %796 = vmatpush1.msra.mxu0 %v795
  %797 = vmatprep.subr.mxu0 0.0
  %v798 = vand.u32 %v531, 4294901760
  %799 = vmatpush1.msra.mxu0 %v798
  %800 = vmatprep.subr.mxu0 0.0
  %v801 = vand.u32 %v532, 4294901760
  %802 = vmatpush1.msra.mxu0 %v801
  %803 = vmatprep.subr.mxu0 0.0
  %v804 = vand.u32 %v533, 4294901760
  %805 = vmatpush1.msra.mxu0 %v804
  %806 = vmatprep.subr.mxu0 0.0
  %807 = vmatpush1.msra.mxu0 0.0
  %808 = vmatprep.subr.mxu0 0.0
  %809 = vmatpush1.msra.mxu0 0.0
  %810 = vmatprep.subr.mxu0 0.0
  %811 = vmatpush1.msra.mxu0 0.0
  %812 = vmatprep.subr.mxu0 0.0
  %813 = vmatpush1.msra.mxu0 0.0
  %814 = vmatprep.subr.mxu0 0.0
  %815 = vmatpush1.msra.mxu0 0.0
  %816 = vmatprep.subr.mxu0 0.0
  %817 = vmatpush1.msra.mxu0 0.0
  %818 = vmatprep.subr.mxu0 0.0
  %819 = vmatpush1.msra.mxu0 0.0
  %820 = vmatprep.subr.mxu0 0.0
  %821 = vmatpush1.msra.mxu0 0.0
  %822 = vmatprep.subr.mxu0 0.0
  %823 = vmatpush1.msra.mxu0 0.0
  %824 = vmatprep.subr.mxu0 0.0
  %825 = vmatpush1.msra.mxu0 0.0
  %826 = vmatprep.subr.mxu0 0.0
  %827 = vmatpush1.msra.mxu0 0.0
  %828 = vmatprep.subr.mxu0 0.0
  %829 = vmatpush1.msra.mxu0 0.0
  %830 = vmatprep.subr.mxu0 0.0
  %831 = vmatpush1.msra.mxu0 0.0
  %832 = vmatprep.subr.mxu0 0.0
  %833 = vmatpush1.msra.mxu0 0.0
  %834 = vmatprep.subr.mxu0 0.0
  %835 = vmatpush1.msra.mxu0 0.0
  %836 = vmatprep.subr.mxu0 0.0
  %837 = vmatpush1.msra.mxu0 0.0
  %838 = vmatprep.subr.mxu0 0.0
  %839 = vmatpush1.msra.mxu0 0.0
  %840 = vmatprep.subr.mxu0 0.0
  %841 = vmatpush1.msra.mxu0 0.0
  %842 = vmatprep.subr.mxu0 0.0
  %843 = vmatpush1.msra.mxu0 0.0
  %844 = vmatprep.subr.mxu0 0.0
  %845 = vmatpush1.msra.mxu0 0.0
  %846 = vmatprep.subr.mxu0 0.0
  %847 = vmatpush1.msra.mxu0 0.0
  %848 = vmatprep.subr.mxu0 0.0
  %849 = vmatpush1.msra.mxu0 0.0
  %850 = vmatprep.subr.mxu0 0.0
  %851 = vmatpush1.msra.mxu0 0.0
  %852 = vmatprep.subr.mxu0 0.0
  %853 = vmatpush1.msra.mxu0 0.0
  %854 = vmatprep.subr.mxu0 0.0
  %855 = vmatpush1.msra.mxu0 0.0
  %856 = vmatprep.subr.mxu0 0.0
  %857 = vmatpush1.msra.mxu0 0.0
  %858 = vmatprep.subr.mxu0 0.0
  %859 = vmatpush1.msra.mxu0 0.0
  %860 = vmatprep.subr.mxu0 0.0
  %861 = vmatpush1.msra.mxu0 0.0
  %862 = vmatprep.mubr.f32.mxu0 0.0
  %v863 = vand.u32 %v542, 4294901760
  %v864 = vsub.f32 %v542, %v863
  %v865 = vand.u32 %v864, 4294901760
  %866 = vmatmul.mubr.f32.gmra.mrb[0].mxu0 %v865
  %v867 = vpop.f32.mrb[0].mxu0
  %v868 = vadd.f32 %v791, %v867
  %v869 = vpop.f32.mrb[0].mxu0
  %870 = vdwg.mxu0
  %871 = vmatprep.subr.mxu0 0.0
  %v872 = vand.u32 %v530, 4294901760
  %v873 = vsub.f32 %v530, %v872
  %v874 = vand.u32 %v873, 4294901760
  %875 = vmatpush1.msra.mxu0 %v874
  %876 = vmatprep.subr.mxu0 0.0
  %v877 = vand.u32 %v531, 4294901760
  %v878 = vsub.f32 %v531, %v877
  %v879 = vand.u32 %v878, 4294901760
  %880 = vmatpush1.msra.mxu0 %v879
  %881 = vmatprep.subr.mxu0 0.0
  %v882 = vand.u32 %v532, 4294901760
  %v883 = vsub.f32 %v532, %v882
  %v884 = vand.u32 %v883, 4294901760
  %885 = vmatpush1.msra.mxu0 %v884
  %886 = vmatprep.subr.mxu0 0.0
  %v887 = vand.u32 %v533, 4294901760
  %v888 = vsub.f32 %v533, %v887
  %v889 = vand.u32 %v888, 4294901760
  %890 = vmatpush1.msra.mxu0 %v889
  %891 = vmatprep.subr.mxu0 0.0
  %892 = vmatpush1.msra.mxu0 0.0
  %893 = vmatprep.subr.mxu0 0.0
  %894 = vmatpush1.msra.mxu0 0.0
  %895 = vmatprep.subr.mxu0 0.0
  %896 = vmatpush1.msra.mxu0 0.0
  %897 = vmatprep.subr.mxu0 0.0
  %898 = vmatpush1.msra.mxu0 0.0
  %899 = vmatprep.subr.mxu0 0.0
  %900 = vmatpush1.msra.mxu0 0.0
  %901 = vmatprep.subr.mxu0 0.0
  %902 = vmatpush1.msra.mxu0 0.0
  %903 = vmatprep.subr.mxu0 0.0
  %904 = vmatpush1.msra.mxu0 0.0
  %905 = vmatprep.subr.mxu0 0.0
  %906 = vmatpush1.msra.mxu0 0.0
  %907 = vmatprep.subr.mxu0 0.0
  %908 = vmatpush1.msra.mxu0 0.0
  %909 = vmatprep.subr.mxu0 0.0
  %910 = vmatpush1.msra.mxu0 0.0
  %911 = vmatprep.subr.mxu0 0.0
  %912 = vmatpush1.msra.mxu0 0.0
  %913 = vmatprep.subr.mxu0 0.0
  %914 = vmatpush1.msra.mxu0 0.0
  %915 = vmatprep.subr.mxu0 0.0
  %916 = vmatpush1.msra.mxu0 0.0
  %917 = vmatprep.subr.mxu0 0.0
  %918 = vmatpush1.msra.mxu0 0.0
  %919 = vmatprep.subr.mxu0 0.0
  %920 = vmatpush1.msra.mxu0 0.0
  %921 = vmatprep.subr.mxu0 0.0
  %922 = vmatpush1.msra.mxu0 0.0
  %923 = vmatprep.subr.mxu0 0.0
  %924 = vmatpush1.msra.mxu0 0.0
  %925 = vmatprep.subr.mxu0 0.0
  %926 = vmatpush1.msra.mxu0 0.0
  %927 = vmatprep.subr.mxu0 0.0
  %928 = vmatpush1.msra.mxu0 0.0
  %929 = vmatprep.subr.mxu0 0.0
  %930 = vmatpush1.msra.mxu0 0.0
  %931 = vmatprep.subr.mxu0 0.0
  %932 = vmatpush1.msra.mxu0 0.0
  %933 = vmatprep.subr.mxu0 0.0
  %934 = vmatpush1.msra.mxu0 0.0
  %935 = vmatprep.subr.mxu0 0.0
  %936 = vmatpush1.msra.mxu0 0.0
  %937 = vmatprep.subr.mxu0 0.0
  %938 = vmatpush1.msra.mxu0 0.0
  %939 = vmatprep.subr.mxu0 0.0
  %940 = vmatpush1.msra.mxu0 0.0
  %941 = vmatprep.subr.mxu0 0.0
  %942 = vmatpush1.msra.mxu0 0.0
  %943 = vmatprep.subr.mxu0 0.0
  %944 = vmatpush1.msra.mxu0 0.0
  %945 = vmatprep.subr.mxu0 0.0
  %946 = vmatpush1.msra.mxu0 0.0
  %947 = vmatprep.mubr.f32.mxu0 0.0
  %v948 = vand.u32 %v542, 4294901760
  %949 = vmatmul.mubr.f32.gmra.mrb[0].mxu0 %v948
  %v950 = vpop.f32.mrb[0].mxu0
  %v951 = vadd.f32 %v868, %v950
  %v952 = vpop.f32.mrb[0].mxu0
  %953 = vdwg.mxu0
  %954 = vmatprep.subr.mxu0 0.0
  %v955 = vand.u32 %v530, 4294901760
  %956 = vmatpush1.msra.mxu0 %v955
  %957 = vmatprep.subr.mxu0 0.0
  %v958 = vand.u32 %v531, 4294901760
  %959 = vmatpush1.msra.mxu0 %v958
  %960 = vmatprep.subr.mxu0 0.0
  %v961 = vand.u32 %v532, 4294901760
  %962 = vmatpush1.msra.mxu0 %v961
  %963 = vmatprep.subr.mxu0 0.0
  %v964 = vand.u32 %v533, 4294901760
  %965 = vmatpush1.msra.mxu0 %v964
  %966 = vmatprep.subr.mxu0 0.0
  %967 = vmatpush1.msra.mxu0 0.0
  %968 = vmatprep.subr.mxu0 0.0
  %969 = vmatpush1.msra.mxu0 0.0
  %970 = vmatprep.subr.mxu0 0.0
  %971 = vmatpush1.msra.mxu0 0.0
  %972 = vmatprep.subr.mxu0 0.0
  %973 = vmatpush1.msra.mxu0 0.0
  %974 = vmatprep.subr.mxu0 0.0
  %975 = vmatpush1.msra.mxu0 0.0
  %976 = vmatprep.subr.mxu0 0.0
  %977 = vmatpush1.msra.mxu0 0.0
  %978 = vmatprep.subr.mxu0 0.0
  %979 = vmatpush1.msra.mxu0 0.0
  %980 = vmatprep.subr.mxu0 0.0
  %981 = vmatpush1.msra.mxu0 0.0
  %982 = vmatprep.subr.mxu0 0.0
  %983 = vmatpush1.msra.mxu0 0.0
  %984 = vmatprep.subr.mxu0 0.0
  %985 = vmatpush1.msra.mxu0 0.0
  %986 = vmatprep.subr.mxu0 0.0
  %987 = vmatpush1.msra.mxu0 0.0
  %988 = vmatprep.subr.mxu0 0.0
  %989 = vmatpush1.msra.mxu0 0.0
  %990 = vmatprep.subr.mxu0 0.0
  %991 = vmatpush1.msra.mxu0 0.0
  %992 = vmatprep.subr.mxu0 0.0
  %993 = vmatpush1.msra.mxu0 0.0
  %994 = vmatprep.subr.mxu0 0.0
  %995 = vmatpush1.msra.mxu0 0.0
  %996 = vmatprep.subr.mxu0 0.0
  %997 = vmatpush1.msra.mxu0 0.0
  %998 = vmatprep.subr.mxu0 0.0
  %999 = vmatpush1.msra.mxu0 0.0
  %1000 = vmatprep.subr.mxu0 0.0
  %1001 = vmatpush1.msra.mxu0 0.0
  %1002 = vmatprep.subr.mxu0 0.0
  %1003 = vmatpush1.msra.mxu0 0.0
  %1004 = vmatprep.subr.mxu0 0.0
  %1005 = vmatpush1.msra.mxu0 0.0
  %1006 = vmatprep.subr.mxu0 0.0
  %1007 = vmatpush1.msra.mxu0 0.0
  %1008 = vmatprep.subr.mxu0 0.0
  %1009 = vmatpush1.msra.mxu0 0.0
  %1010 = vmatprep.subr.mxu0 0.0
  %1011 = vmatpush1.msra.mxu0 0.0
  %1012 = vmatprep.subr.mxu0 0.0
  %1013 = vmatpush1.msra.mxu0 0.0
  %1014 = vmatprep.subr.mxu0 0.0
  %1015 = vmatpush1.msra.mxu0 0.0
  %1016 = vmatprep.subr.mxu0 0.0
  %1017 = vmatpush1.msra.mxu0 0.0
  %1018 = vmatprep.subr.mxu0 0.0
  %1019 = vmatpush1.msra.mxu0 0.0
  %1020 = vmatprep.subr.mxu0 0.0
  %1021 = vmatpush1.msra.mxu0 0.0
  %1022 = vmatprep.mubr.f32.mxu0 0.0
  %v1023 = vand.u32 %v542, 4294901760
  %1024 = vmatmul.mubr.f32.gmra.mrb[0].mxu0 %v1023
  %v1025 = vpop.f32.mrb[0].mxu0
  %v1026 = vadd.f32 %v951, %v1025
  %v1027 = vpop.f32.mrb[0].mxu0
  %1028 = vdwg.mxu0
  %v1029 = vmax.f32 %v1026, 0.0
  %v1030 = vld [vmem:[%s5] sm:$0xff]
  %v1031 = vld [vmem:[%s5 + $0x8] sm:$0xff]
  %v1032 = vld [vmem:[#allocation2] sm:$0x1]
  %v1034 = vlaneseq
  %v1035 = vshrl.u32 %v1034, 7
  %v1036 = vsub.s32 0, %v1035
  %v1037 = vrot.slane %v1032, %v1036
  %vm1039 = vcmask 130048
  %v1041 = vsel %vm1039, %v1029, 0
  %1043 = vmatprep.subr.mxu0 0.0
  %v1044 = vand.u32 %v1030, 4294901760
  %1045 = vmatpush1.msra.mxu0 %v1044
  %1046 = vmatprep.subr.mxu0 0.0
  %v1047 = vand.u32 %v1031, 4294901760
  %1048 = vmatpush1.msra.mxu0 %v1047
  %1049 = vmatprep.subr.mxu0 0.0
  %1050 = vmatpush1.msra.mxu0 0.0
  %1051 = vmatprep.subr.mxu0 0.0
  %1052 = vmatpush1.msra.mxu0 0.0
  %1053 = vmatprep.subr.mxu0 0.0
  %1054 = vmatpush1.msra.mxu0 0.0
  %1055 = vmatprep.subr.mxu0 0.0
  %1056 = vmatpush1.msra.mxu0 0.0
  %1057 = vmatprep.subr.mxu0 0.0
  %1058 = vmatpush1.msra.mxu0 0.0
  %1059 = vmatprep.subr.mxu0 0.0
  %1060 = vmatpush1.msra.mxu0 0.0
  %1061 = vmatprep.subr.mxu0 0.0
  %1062 = vmatpush1.msra.mxu0 0.0
  %1063 = vmatprep.subr.mxu0 0.0
  %1064 = vmatpush1.msra.mxu0 0.0
  %1065 = vmatprep.subr.mxu0 0.0
  %1066 = vmatpush1.msra.mxu0 0.0
  %1067 = vmatprep.subr.mxu0 0.0
  %1068 = vmatpush1.msra.mxu0 0.0
  %1069 = vmatprep.subr.mxu0 0.0
  %1070 = vmatpush1.msra.mxu0 0.0
  %1071 = vmatprep.subr.mxu0 0.0
  %1072 = vmatpush1.msra.mxu0 0.0
  %1073 = vmatprep.subr.mxu0 0.0
  %1074 = vmatpush1.msra.mxu0 0.0
  %1075 = vmatprep.subr.mxu0 0.0
  %1076 = vmatpush1.msra.mxu0 0.0
  %1077 = vmatprep.subr.mxu0 0.0
  %1078 = vmatpush1.msra.mxu0 0.0
  %1079 = vmatprep.subr.mxu0 0.0
  %1080 = vmatpush1.msra.mxu0 0.0
  %1081 = vmatprep.subr.mxu0 0.0
  %1082 = vmatpush1.msra.mxu0 0.0
  %1083 = vmatprep.subr.mxu0 0.0
  %1084 = vmatpush1.msra.mxu0 0.0
  %1085 = vmatprep.subr.mxu0 0.0
  %1086 = vmatpush1.msra.mxu0 0.0
  %1087 = vmatprep.subr.mxu0 0.0
  %1088 = vmatpush1.msra.mxu0 0.0
  %1089 = vmatprep.subr.mxu0 0.0
  %1090 = vmatpush1.msra.mxu0 0.0
  %1091 = vmatprep.subr.mxu0 0.0
  %1092 = vmatpush1.msra.mxu0 0.0
  %1093 = vmatprep.subr.mxu0 0.0
  %1094 = vmatpush1.msra.mxu0 0.0
  %1095 = vmatprep.subr.mxu0 0.0
  %1096 = vmatpush1.msra.mxu0 0.0
  %1097 = vmatprep.subr.mxu0 0.0
  %1098 = vmatpush1.msra.mxu0 0.0
  %1099 = vmatprep.subr.mxu0 0.0
  %1100 = vmatpush1.msra.mxu0 0.0
  %1101 = vmatprep.subr.mxu0 0.0
  %1102 = vmatpush1.msra.mxu0 0.0
  %1103 = vmatprep.subr.mxu0 0.0
  %1104 = vmatpush1.msra.mxu0 0.0
  %1105 = vmatprep.subr.mxu0 0.0
  %1106 = vmatpush1.msra.mxu0 0.0
  %1107 = vmatprep.subr.mxu0 0.0
  %1108 = vmatpush1.msra.mxu0 0.0
  %1109 = vmatprep.mubr.f32.mxu0 0.0
  %v1110 = vand.u32 %v1041, 4294901760
  %v1111 = vsub.f32 %v1041, %v1110
  %v1112 = vand.u32 %v1111, 4294901760
  %v1113 = vsub.f32 %v1111, %v1112
  %v1114 = vand.u32 %v1113, 4294901760
  %1115 = vmatmul.mubr.f32.gmra.mrb[0].mxu0 %v1114
  %v1116 = vpop.f32.mrb[0].mxu0
  %v1117 = vadd.f32 %v1037, %v1116
  %v1118 = vpop.f32.mrb[0].mxu0
  %1119 = vdwg.mxu0
  %1120 = vmatprep.subr.mxu0 0.0
  %v1121 = vand.u32 %v1030, 4294901760
  %v1122 = vsub.f32 %v1030, %v1121
  %v1123 = vand.u32 %v1122, 4294901760
  %v1124 = vsub.f32 %v1122, %v1123
  %v1125 = vand.u32 %v1124, 4294901760
  %1126 = vmatpush1.msra.mxu0 %v1125
  %1127 = vmatprep.subr.mxu0 0.0
  %v1128 = vand.u32 %v1031, 4294901760
  %v1129 = vsub.f32 %v1031, %v1128
  %v1130 = vand.u32 %v1129, 4294901760
  %v1131 = vsub.f32 %v1129, %v1130
  %v1132 = vand.u32 %v1131, 4294901760
  %1133 = vmatpush1.msra.mxu0 %v1132
  %1134 = vmatprep.subr.mxu0 0.0
  %1135 = vmatpush1.msra.mxu0 0.0
  %1136 = vmatprep.subr.mxu0 0.0
  %1137 = vmatpush1.msra.mxu0 0.0
  %1138 = vmatprep.subr.mxu0 0.0
  %1139 = vmatpush1.msra.mxu0 0.0
  %1140 = vmatprep.subr.mxu0 0.0
  %1141 = vmatpush1.msra.mxu0 0.0
  %1142 = vmatprep.subr.mxu0 0.0
  %1143 = vmatpush1.msra.mxu0 0.0
  %1144 = vmatprep.subr.mxu0 0.0
  %1145 = vmatpush1.msra.mxu0 0.0
  %1146 = vmatprep.subr.mxu0 0.0
  %1147 = vmatpush1.msra.mxu0 0.0
  %1148 = vmatprep.subr.mxu0 0.0
  %1149 = vmatpush1.msra.mxu0 0.0
  %1150 = vmatprep.subr.mxu0 0.0
  %1151 = vmatpush1.msra.mxu0 0.0
  %1152 = vmatprep.subr.mxu0 0.0
  %1153 = vmatpush1.msra.mxu0 0.0
  %1154 = vmatprep.subr.mxu0 0.0
  %1155 = vmatpush1.msra.mxu0 0.0
  %1156 = vmatprep.subr.mxu0 0.0
  %1157 = vmatpush1.msra.mxu0 0.0
  %1158 = vmatprep.subr.mxu0 0.0
  %1159 = vmatpush1.msra.mxu0 0.0
  %1160 = vmatprep.subr.mxu0 0.0
  %1161 = vmatpush1.msra.mxu0 0.0
  %1162 = vmatprep.subr.mxu0 0.0
  %1163 = vmatpush1.msra.mxu0 0.0
  %1164 = vmatprep.subr.mxu0 0.0
  %1165 = vmatpush1.msra.mxu0 0.0
  %1166 = vmatprep.subr.mxu0 0.0
  %1167 = vmatpush1.msra.mxu0 0.0
  %1168 = vmatprep.subr.mxu0 0.0
  %1169 = vmatpush1.msra.mxu0 0.0
  %1170 = vmatprep.subr.mxu0 0.0
  %1171 = vmatpush1.msra.mxu0 0.0
  %1172 = vmatprep.subr.mxu0 0.0
  %1173 = vmatpush1.msra.mxu0 0.0
  %1174 = vmatprep.subr.mxu0 0.0
  %1175 = vmatpush1.msra.mxu0 0.0
  %1176 = vmatprep.subr.mxu0 0.0
  %1177 = vmatpush1.msra.mxu0 0.0
  %1178 = vmatprep.subr.mxu0 0.0
  %1179 = vmatpush1.msra.mxu0 0.0
  %1180 = vmatprep.subr.mxu0 0.0
  %1181 = vmatpush1.msra.mxu0 0.0
  %1182 = vmatprep.subr.mxu0 0.0
  %1183 = vmatpush1.msra.mxu0 0.0
  %1184 = vmatprep.subr.mxu0 0.0
  %1185 = vmatpush1.msra.mxu0 0.0
  %1186 = vmatprep.subr.mxu0 0.0
  %1187 = vmatpush1.msra.mxu0 0.0
  %1188 = vmatprep.subr.mxu0 0.0
  %1189 = vmatpush1.msra.mxu0 0.0
  %1190 = vmatprep.subr.mxu0 0.0
  %1191 = vmatpush1.msra.mxu0 0.0
  %1192 = vmatprep.subr.mxu0 0.0
  %1193 = vmatpush1.msra.mxu0 0.0
  %1194 = vmatprep.mubr.f32.mxu0 0.0
  %v1195 = vand.u32 %v1041, 4294901760
  %1196 = vmatmul.mubr.f32.gmra.mrb[0].mxu0 %v1195
  %v1197 = vpop.f32.mrb[0].mxu0
  %v1198 = vadd.f32 %v1117, %v1197
  %v1199 = vpop.f32.mrb[0].mxu0
  %1200 = vdwg.mxu0
  %1201 = vmatprep.subr.mxu0 0.0
  %v1202 = vand.u32 %v1030, 4294901760
  %v1203 = vsub.f32 %v1030, %v1202
  %1204 = vmatpush1.msra.mxu0 %v1203
  %1205 = vmatprep.subr.mxu0 0.0
  %v1206 = vand.u32 %v1031, 4294901760
  %v1207 = vsub.f32 %v1031, %v1206
  %1208 = vmatpush1.msra.mxu0 %v1207
  %1209 = vmatprep.subr.mxu0 0.0
  %1210 = vmatpush1.msra.mxu0 0.0
  %1211 = vmatprep.subr.mxu0 0.0
  %1212 = vmatpush1.msra.mxu0 0.0
  %1213 = vmatprep.subr.mxu0 0.0
  %1214 = vmatpush1.msra.mxu0 0.0
  %1215 = vmatprep.subr.mxu0 0.0
  %1216 = vmatpush1.msra.mxu0 0.0
  %1217 = vmatprep.subr.mxu0 0.0
  %1218 = vmatpush1.msra.mxu0 0.0
  %1219 = vmatprep.subr.mxu0 0.0
  %1220 = vmatpush1.msra.mxu0 0.0
  %1221 = vmatprep.subr.mxu0 0.0
  %1222 = vmatpush1.msra.mxu0 0.0
  %1223 = vmatprep.subr.mxu0 0.0
  %1224 = vmatpush1.msra.mxu0 0.0
  %1225 = vmatprep.subr.mxu0 0.0
  %1226 = vmatpush1.msra.mxu0 0.0
  %1227 = vmatprep.subr.mxu0 0.0
  %1228 = vmatpush1.msra.mxu0 0.0
  %1229 = vmatprep.subr.mxu0 0.0
  %1230 = vmatpush1.msra.mxu0 0.0
  %1231 = vmatprep.subr.mxu0 0.0
  %1232 = vmatpush1.msra.mxu0 0.0
  %1233 = vmatprep.subr.mxu0 0.0
  %1234 = vmatpush1.msra.mxu0 0.0
  %1235 = vmatprep.subr.mxu0 0.0
  %1236 = vmatpush1.msra.mxu0 0.0
  %1237 = vmatprep.subr.mxu0 0.0
  %1238 = vmatpush1.msra.mxu0 0.0
  %1239 = vmatprep.subr.mxu0 0.0
  %1240 = vmatpush1.msra.mxu0 0.0
  %1241 = vmatprep.subr.mxu0 0.0
  %1242 = vmatpush1.msra.mxu0 0.0
  %1243 = vmatprep.subr.mxu0 0.0
  %1244 = vmatpush1.msra.mxu0 0.0
  %1245 = vmatprep.subr.mxu0 0.0
  %1246 = vmatpush1.msra.mxu0 0.0
  %1247 = vmatprep.subr.mxu0 0.0
  %1248 = vmatpush1.msra.mxu0 0.0
  %1249 = vmatprep.subr.mxu0 0.0
  %1250 = vmatpush1.msra.mxu0 0.0
  %1251 = vmatprep.subr.mxu0 0.0
  %1252 = vmatpush1.msra.mxu0 0.0
  %1253 = vmatprep.subr.mxu0 0.0
  %1254 = vmatpush1.msra.mxu0 0.0
  %1255 = vmatprep.subr.mxu0 0.0
  %1256 = vmatpush1.msra.mxu0 0.0
  %1257 = vmatprep.subr.mxu0 0.0
  %1258 = vmatpush1.msra.mxu0 0.0
  %1259 = vmatprep.subr.mxu0 0.0
  %1260 = vmatpush1.msra.mxu0 0.0
  %1261 = vmatprep.subr.mxu0 0.0
  %1262 = vmatpush1.msra.mxu0 0.0
  %1263 = vmatprep.subr.mxu0 0.0
  %1264 = vmatpush1.msra.mxu0 0.0
  %1265 = vmatprep.subr.mxu0 0.0
  %1266 = vmatpush1.msra.mxu0 0.0
  %1267 = vmatprep.subr.mxu0 0.0
  %1268 = vmatpush1.msra.mxu0 0.0
  %1269 = vmatprep.mubr.f32.mxu0 0.0
  %v1270 = vand.u32 %v1041, 4294901760
  %v1271 = vsub.f32 %v1041, %v1270
  %1272 = vmatmul.mubr.f32.gmra.mrb[0].mxu0 %v1271
  %v1273 = vpop.f32.mrb[0].mxu0
  %v1274 = vadd.f32 %v1198, %v1273
  %v1275 = vpop.f32.mrb[0].mxu0
  %1276 = vdwg.mxu0
  %1277 = vmatprep.subr.mxu0 0.0
  %v1278 = vand.u32 %v1030, 4294901760
  %1279 = vmatpush1.msra.mxu0 %v1278
  %1280 = vmatprep.subr.mxu0 0.0
  %v1281 = vand.u32 %v1031, 4294901760
  %1282 = vmatpush1.msra.mxu0 %v1281
  %1283 = vmatprep.subr.mxu0 0.0
  %1284 = vmatpush1.msra.mxu0 0.0
  %1285 = vmatprep.subr.mxu0 0.0
  %1286 = vmatpush1.msra.mxu0 0.0
  %1287 = vmatprep.subr.mxu0 0.0
  %1288 = vmatpush1.msra.mxu0 0.0
  %1289 = vmatprep.subr.mxu0 0.0
  %1290 = vmatpush1.msra.mxu0 0.0
  %1291 = vmatprep.subr.mxu0 0.0
  %1292 = vmatpush1.msra.mxu0 0.0
  %1293 = vmatprep.subr.mxu0 0.0
  %1294 = vmatpush1.msra.mxu0 0.0
  %1295 = vmatprep.subr.mxu0 0.0
  %1296 = vmatpush1.msra.mxu0 0.0
  %1297 = vmatprep.subr.mxu0 0.0
  %1298 = vmatpush1.msra.mxu0 0.0
  %1299 = vmatprep.subr.mxu0 0.0
  %1300 = vmatpush1.msra.mxu0 0.0
  %1301 = vmatprep.subr.mxu0 0.0
  %1302 = vmatpush1.msra.mxu0 0.0
  %1303 = vmatprep.subr.mxu0 0.0
  %1304 = vmatpush1.msra.mxu0 0.0
  %1305 = vmatprep.subr.mxu0 0.0
  %1306 = vmatpush1.msra.mxu0 0.0
  %1307 = vmatprep.subr.mxu0 0.0
  %1308 = vmatpush1.msra.mxu0 0.0
  %1309 = vmatprep.subr.mxu0 0.0
  %1310 = vmatpush1.msra.mxu0 0.0
  %1311 = vmatprep.subr.mxu0 0.0
  %1312 = vmatpush1.msra.mxu0 0.0
  %1313 = vmatprep.subr.mxu0 0.0
  %1314 = vmatpush1.msra.mxu0 0.0
  %1315 = vmatprep.subr.mxu0 0.0
  %1316 = vmatpush1.msra.mxu0 0.0
  %1317 = vmatprep.subr.mxu0 0.0
  %1318 = vmatpush1.msra.mxu0 0.0
  %1319 = vmatprep.subr.mxu0 0.0
  %1320 = vmatpush1.msra.mxu0 0.0
  %1321 = vmatprep.subr.mxu0 0.0
  %1322 = vmatpush1.msra.mxu0 0.0
  %1323 = vmatprep.subr.mxu0 0.0
  %1324 = vmatpush1.msra.mxu0 0.0
  %1325 = vmatprep.subr.mxu0 0.0
  %1326 = vmatpush1.msra.mxu0 0.0
  %1327 = vmatprep.subr.mxu0 0.0
  %1328 = vmatpush1.msra.mxu0 0.0
  %1329 = vmatprep.subr.mxu0 0.0
  %1330 = vmatpush1.msra.mxu0 0.0
  %1331 = vmatprep.subr.mxu0 0.0
  %1332 = vmatpush1.msra.mxu0 0.0
  %1333 = vmatprep.subr.mxu0 0.0
  %1334 = vmatpush1.msra.mxu0 0.0
  %1335 = vmatprep.subr.mxu0 0.0
  %1336 = vmatpush1.msra.mxu0 0.0
  %1337 = vmatprep.subr.mxu0 0.0
  %1338 = vmatpush1.msra.mxu0 0.0
  %1339 = vmatprep.subr.mxu0 0.0
  %1340 = vmatpush1.msra.mxu0 0.0
  %1341 = vmatprep.subr.mxu0 0.0
  %1342 = vmatpush1.msra.mxu0 0.0
  %1343 = vmatprep.mubr.f32.mxu0 0.0
  %v1344 = vand.u32 %v1041, 4294901760
  %v1345 = vsub.f32 %v1041, %v1344
  %v1346 = vand.u32 %v1345, 4294901760
  %1347 = vmatmul.mubr.f32.gmra.mrb[0].mxu0 %v1346
  %v1348 = vpop.f32.mrb[0].mxu0
  %v1349 = vadd.f32 %v1274, %v1348
  %v1350 = vpop.f32.mrb[0].mxu0
  %1351 = vdwg.mxu0
  %1352 = vmatprep.subr.mxu0 0.0
  %v1353 = vand.u32 %v1030, 4294901760
  %v1354 = vsub.f32 %v1030, %v1353
  %v1355 = vand.u32 %v1354, 4294901760
  %1356 = vmatpush1.msra.mxu0 %v1355
  %1357 = vmatprep.subr.mxu0 0.0
  %v1358 = vand.u32 %v1031, 4294901760
  %v1359 = vsub.f32 %v1031, %v1358
  %v1360 = vand.u32 %v1359, 4294901760
  %1361 = vmatpush1.msra.mxu0 %v1360
  %1362 = vmatprep.subr.mxu0 0.0
  %1363 = vmatpush1.msra.mxu0 0.0
  %1364 = vmatprep.subr.mxu0 0.0
  %1365 = vmatpush1.msra.mxu0 0.0
  %1366 = vmatprep.subr.mxu0 0.0
  %1367 = vmatpush1.msra.mxu0 0.0
  %1368 = vmatprep.subr.mxu0 0.0
  %1369 = vmatpush1.msra.mxu0 0.0
  %1370 = vmatprep.subr.mxu0 0.0
  %1371 = vmatpush1.msra.mxu0 0.0
  %1372 = vmatprep.subr.mxu0 0.0
  %1373 = vmatpush1.msra.mxu0 0.0
  %1374 = vmatprep.subr.mxu0 0.0
  %1375 = vmatpush1.msra.mxu0 0.0
  %1376 = vmatprep.subr.mxu0 0.0
  %1377 = vmatpush1.msra.mxu0 0.0
  %1378 = vmatprep.subr.mxu0 0.0
  %1379 = vmatpush1.msra.mxu0 0.0
  %1380 = vmatprep.subr.mxu0 0.0
  %1381 = vmatpush1.msra.mxu0 0.0
  %1382 = vmatprep.subr.mxu0 0.0
  %1383 = vmatpush1.msra.mxu0 0.0
  %1384 = vmatprep.subr.mxu0 0.0
  %1385 = vmatpush1.msra.mxu0 0.0
  %1386 = vmatprep.subr.mxu0 0.0
  %1387 = vmatpush1.msra.mxu0 0.0
  %1388 = vmatprep.subr.mxu0 0.0
  %1389 = vmatpush1.msra.mxu0 0.0
  %1390 = vmatprep.subr.mxu0 0.0
  %1391 = vmatpush1.msra.mxu0 0.0
  %1392 = vmatprep.subr.mxu0 0.0
  %1393 = vmatpush1.msra.mxu0 0.0
  %1394 = vmatprep.subr.mxu0 0.0
  %1395 = vmatpush1.msra.mxu0 0.0
  %1396 = vmatprep.subr.mxu0 0.0
  %1397 = vmatpush1.msra.mxu0 0.0
  %1398 = vmatprep.subr.mxu0 0.0
  %1399 = vmatpush1.msra.mxu0 0.0
  %1400 = vmatprep.subr.mxu0 0.0
  %1401 = vmatpush1.msra.mxu0 0.0
  %1402 = vmatprep.subr.mxu0 0.0
  %1403 = vmatpush1.msra.mxu0 0.0
  %1404 = vmatprep.subr.mxu0 0.0
  %1405 = vmatpush1.msra.mxu0 0.0
  %1406 = vmatprep.subr.mxu0 0.0
  %1407 = vmatpush1.msra.mxu0 0.0
  %1408 = vmatprep.subr.mxu0 0.0
  %1409 = vmatpush1.msra.mxu0 0.0
  %1410 = vmatprep.subr.mxu0 0.0
  %1411 = vmatpush1.msra.mxu0 0.0
  %1412 = vmatprep.subr.mxu0 0.0
  %1413 = vmatpush1.msra.mxu0 0.0
  %1414 = vmatprep.subr.mxu0 0.0
  %1415 = vmatpush1.msra.mxu0 0.0
  %1416 = vmatprep.subr.mxu0 0.0
  %1417 = vmatpush1.msra.mxu0 0.0
  %1418 = vmatprep.subr.mxu0 0.0
  %1419 = vmatpush1.msra.mxu0 0.0
  %1420 = vmatprep.subr.mxu0 0.0
  %1421 = vmatpush1.msra.mxu0 0.0
  %1422 = vmatprep.mubr.f32.mxu0 0.0
  %v1423 = vand.u32 %v1041, 4294901760
  %1424 = vmatmul.mubr.f32.gmra.mrb[0].mxu0 %v1423
  %v1425 = vpop.f32.mrb[0].mxu0
  %v1426 = vadd.f32 %v1349, %v1425
  %v1427 = vpop.f32.mrb[0].mxu0
  %1428 = vdwg.mxu0
  %1429 = vmatprep.subr.mxu0 0.0
  %v1430 = vand.u32 %v1030, 4294901760
  %1431 = vmatpush1.msra.mxu0 %v1430
  %1432 = vmatprep.subr.mxu0 0.0
  %v1433 = vand.u32 %v1031, 4294901760
  %1434 = vmatpush1.msra.mxu0 %v1433
  %1435 = vmatprep.subr.mxu0 0.0
  %1436 = vmatpush1.msra.mxu0 0.0
  %1437 = vmatprep.subr.mxu0 0.0
  %1438 = vmatpush1.msra.mxu0 0.0
  %1439 = vmatprep.subr.mxu0 0.0
  %1440 = vmatpush1.msra.mxu0 0.0
  %1441 = vmatprep.subr.mxu0 0.0
  %1442 = vmatpush1.msra.mxu0 0.0
  %1443 = vmatprep.subr.mxu0 0.0
  %1444 = vmatpush1.msra.mxu0 0.0
  %1445 = vmatprep.subr.mxu0 0.0
  %1446 = vmatpush1.msra.mxu0 0.0
  %1447 = vmatprep.subr.mxu0 0.0
  %1448 = vmatpush1.msra.mxu0 0.0
  %1449 = vmatprep.subr.mxu0 0.0
  %1450 = vmatpush1.msra.mxu0 0.0
  %1451 = vmatprep.subr.mxu0 0.0
  %1452 = vmatpush1.msra.mxu0 0.0
  %1453 = vmatprep.subr.mxu0 0.0
  %1454 = vmatpush1.msra.mxu0 0.0
  %1455 = vmatprep.subr.mxu0 0.0
  %1456 = vmatpush1.msra.mxu0 0.0
  %1457 = vmatprep.subr.mxu0 0.0
  %1458 = vmatpush1.msra.mxu0 0.0
  %1459 = vmatprep.subr.mxu0 0.0
  %1460 = vmatpush1.msra.mxu0 0.0
  %1461 = vmatprep.subr.mxu0 0.0
  %1462 = vmatpush1.msra.mxu0 0.0
  %1463 = vmatprep.subr.mxu0 0.0
  %1464 = vmatpush1.msra.mxu0 0.0
  %1465 = vmatprep.subr.mxu0 0.0
  %1466 = vmatpush1.msra.mxu0 0.0
  %1467 = vmatprep.subr.mxu0 0.0
  %1468 = vmatpush1.msra.mxu0 0.0
  %1469 = vmatprep.subr.mxu0 0.0
  %1470 = vmatpush1.msra.mxu0 0.0
  %1471 = vmatprep.subr.mxu0 0.0
  %1472 = vmatpush1.msra.mxu0 0.0
  %1473 = vmatprep.subr.mxu0 0.0
  %1474 = vmatpush1.msra.mxu0 0.0
  %1475 = vmatprep.subr.mxu0 0.0
  %1476 = vmatpush1.msra.mxu0 0.0
  %1477 = vmatprep.subr.mxu0 0.0
  %1478 = vmatpush1.msra.mxu0 0.0
  %1479 = vmatprep.subr.mxu0 0.0
  %1480 = vmatpush1.msra.mxu0 0.0
  %1481 = vmatprep.subr.mxu0 0.0
  %1482 = vmatpush1.msra.mxu0 0.0
  %1483 = vmatprep.subr.mxu0 0.0
  %1484 = vmatpush1.msra.mxu0 0.0
  %1485 = vmatprep.subr.mxu0 0.0
  %1486 = vmatpush1.msra.mxu0 0.0
  %1487 = vmatprep.subr.mxu0 0.0
  %1488 = vmatpush1.msra.mxu0 0.0
  %1489 = vmatprep.subr.mxu0 0.0
  %1490 = vmatpush1.msra.mxu0 0.0
  %1491 = vmatprep.subr.mxu0 0.0
  %1492 = vmatpush1.msra.mxu0 0.0
  %1493 = vmatprep.subr.mxu0 0.0
  %1494 = vmatpush1.msra.mxu0 0.0
  %1495 = vmatprep.mubr.f32.mxu0 0.0
  %v1496 = vand.u32 %v1041, 4294901760
  %1497 = vmatmul.mubr.f32.gmra.mrb[0].mxu0 %v1496
  %v1498 = vpop.f32.mrb[0].mxu0
  %v1499 = vadd.f32 %v1426, %v1498
  %v1500 = vpop.f32.mrb[0].mxu0
  %1501 = vdwg.mxu0
  %vm1502 = vcmask 7168
  %1503 = vst.msk [vmem:[%s7] sm:$0xff] %vm1502, %v1499
  // Predicated region
  $region30: #{tpu_custom_call.1} parent=0 // pred_check
    _
  $region31: #{tpu_custom_call.1} parent=0 // pred_check_branch
    %1505 = sbr.rel (0) target = $region33
  $region32: #{tpu_custom_call.1} parent=0 // pred_region
    _
  $region33: #{tpu_custom_call.1} parent=0 // pred_fallthru
    _
  // Predicated region
  $region34: #{tpu_custom_call.1} parent=0 // pred_check
    _
  $region35: #{tpu_custom_call.1} parent=0 // pred_check_branch
    %1507 = sbr.rel (0) target = $region37
  $region36: #{tpu_custom_call.1} parent=0 // pred_region
    _
  $region37: #{tpu_custom_call.1} parent=0 // pred_fallthru
    _

</llo_original>
